<compile_context>
chip_gen: v6e
topology: v6e:2x2x1
jax: 0.10.0
libtpu: 0.0.40
codegen_flags: <defaults>
</compile_context>

<pallas_src>
import functools

import numpy as np
import jax
import jax.numpy as jnp
from jax.experimental import pallas as pl
from jax.experimental.pallas import tpu as pltpu


def _names_mask_kernel(tok_ref, mask_ref, out_ref, *, give_answers):
    """Row-masking select over one (tn, L) tile.

    give_answers=False: out = tok with masked rows zeroed   (inputs target)
    give_answers=True : out = tok with unmasked rows zeroed (outputs target)
    """
    tok = tok_ref[...]                                # (tn, L)
    masked = mask_ref[...].astype(jnp.int32) > 0      # (tn, 1) -> bool, broadcasts over lanes
    zeros = jnp.zeros_like(tok)
    if give_answers:
        out_ref[...] = jnp.where(masked, tok, zeros)
    else:
        out_ref[...] = jnp.where(masked, zeros, tok)


def _round_up(x, m):
    return ((x + m - 1) // m) * m


def _row_axis_semantics():
    """Prefer CORE_PARALLEL on v7x (2 TensorCores/chip); 'parallel' elsewhere."""
    try:
        kind = jax.devices()[0].device_kind.lower()
    except Exception:
        kind = ""
    if ("v7" in kind or "7x" in kind) and hasattr(pltpu, "CORE_PARALLEL"):
        return (pltpu.CORE_PARALLEL,)
    return ("parallel",)


# TODO(synk): for give_answers=True with a sparse mask, a scalar-prefetched
# per-tile "any masked row" flag (PrefetchScalarGridSpec) could skip the input
# DMA for all-zero output tiles (~2x less HBM traffic on that path).
def apply_names_mask(tokenized_names: jnp.ndarray,
                     mask_bool: jnp.ndarray,
                     *,
                     give_answers: bool = False,
                     target_tile_bytes: int = 4 << 20,
                     min_pallas_bytes: int = 256 << 10,
                     force_pallas: bool = False) -> jnp.ndarray:
    """Row-masked zeroing of the token matrix via a tiled Pallas kernel.

    Returns the single prediction target selected by `give_answers`.
    """
    N, L = tokenized_names.shape
    dtype = tokenized_names.dtype
    itemsize = jnp.dtype(dtype).itemsize
    mask_flat = (jnp.reshape(mask_bool, (N,)) != 0)

    # Small-input fallback: pallas_call launch fixed costs dominate tiny matrices.
    if not force_pallas and N * L * itemsize < min_pallas_bytes:
        zeros = jnp.zeros_like(tokenized_names)
        m = mask_flat[:, None]
        if give_answers:
            return jnp.where(m, tokenized_names, zeros)
        return jnp.where(m, zeros, tokenized_names)

    # Row tile: multiple of 32 rows (covers int8 (32,128) and int32 (8,128)
    # native tiling), sized so one (tn, L) data tile is ~target_tile_bytes.
    lane_l = _round_up(max(L, 1), 128)      # VMEM lane footprint of the data tile
    row_bytes = lane_l * itemsize
    tn = max(32, min(16384, (target_tile_bytes // row_bytes) // 32 * 32))
    tn = min(tn, _round_up(N, 32))
    grid_n = pl.cdiv(N, tn)                 # ragged last block handled by Pallas

    mask_i8 = mask_flat.astype(jnp.int8)[:, None]      # (N, 1)

    # HBM traffic: read tok + write one target + read mask.
    bytes_accessed = 2 * N * L * itemsize + N

    kernel = functools.partial(_names_mask_kernel, give_answers=give_answers)

    semantics_options = [_row_axis_semantics()]
    if semantics_options[0] != ("parallel",):
        semantics_options.append(("parallel",))        # lowering-failure fallback

    last_err = None
    for sem in semantics_options:
        try:
            return pl.pallas_call(
                kernel,
                out_shape=jax.ShapeDtypeStruct((N, L), dtype),
                grid=(grid_n,),
                in_specs=[
                    pl.BlockSpec((tn, L), lambda i: (i, 0)),   # full-L block: legal for any L
                    pl.BlockSpec((tn, 1), lambda i: (i, 0)),
                ],
                out_specs=pl.BlockSpec((tn, L), lambda i: (i, 0)),
                compiler_params=pltpu.CompilerParams(
                    dimension_semantics=sem,
                    # 2 bufs x (in + out) x ~4 MiB + 2 x mask ~= 18 MiB; set the
                    # scoped limit explicitly so v5e's 16 MiB default is not binding.
                    vmem_limit_bytes=32 << 20),
                cost_estimate=pl.CostEstimate(
                    flops=0, transcendentals=0,
                    bytes_accessed=int(bytes_accessed)),
            )(tokenized_names, mask_i8)
        except Exception as e:      # e.g. CORE_PARALLEL unsupported -> retry "parallel"
            last_err = e
    raise last_err


class NamesModelPallas:
    """JAX/Pallas port of NamesModel (a synthetic masking 'model')."""

    def __init__(self, number_not_real=1, give_answers=False, portion_not_real=None):
        self.number_not_real = number_not_real
        self.give_answers = give_answers
        self.portion_not_real = portion_not_real

    def forward(self, graph_data, rng_key):
        tokenized_names = graph_data['demangled_function_name_tokenized']
        # TODO(synk): host-side nonzero() forces a device->host sync (glue,
        # mirrors torch.nonzero(...).cpu() in the original module).
        should_validate = np.asarray(graph_data['should_validate'])
        original_should_validate = np.nonzero(should_validate)[0]
        if original_should_validate.size == 0:
            raise ValueError("should_validate has no nonzero entries; "
                             "cannot choose rows to mask.")

        if self.portion_not_real:
            number_not_real = int(len(original_should_validate) * self.portion_not_real) + 1
        else:
            number_not_real = self.number_not_real

        k_choice, k_perm = jax.random.split(rng_key)
        # np.random.choice(..., replace=True) equivalent, deterministic via key.
        chosen = jax.random.choice(
            k_choice,
            jnp.asarray(original_should_validate, dtype=jnp.int32),
            shape=(number_not_real,),
            replace=True,
        )
        n_rows = tokenized_names.shape[0]
        mask = jnp.zeros((n_rows,), dtype=jnp.float32).at[chosen].set(1.0)
        # torch.randperm shuffle of the mask.
        perm = jax.random.permutation(k_perm, n_rows)
        mask_bool = mask[perm] > 0

        # Hot path (Pallas): only compute the target we will actually return.
        target = apply_names_mask(
            tokenized_names, mask_bool, give_answers=self.give_answers)

        new_graph_data = dict(graph_data)
        new_graph_data['should_validate'] = mask_bool
        return target, new_graph_data

    # predict / predict_tensors intentionally assert in the original module.
    def predict(self, examples):
        raise AssertionError('should not get here, this is not a real model.')

    def predict_tensors(self, examples):
        raise AssertionError('should not get here, this is not a real model.')


if __name__ == "__main__":
    key = jax.random.PRNGKey(0)
    ks = jax.random.split(key, 6)

    # Forward demo: 1024 functions, 96 tokens each (large enough to take the
    # Pallas path; ragged 96-lane last dim exercised directly, no padding).
    N, L, VOCAB = 1024, 96, 1000
    tokenized_names = jax.random.randint(ks[0], (N, L), 1, VOCAB, dtype=jnp.int32)
    should_validate = jax.random.bernoulli(ks[1], 0.5, (N,)).astype(jnp.int32)
    should_validate = should_validate.at[0].set(1)  # ensure nonzero() non-empty

    graph_data = {
        'demangled_function_name_tokenized': tokenized_names,
        'should_validate': should_validate,
    }
    tok_np = np.asarray(tokenized_names)

    # --- give_answers=False path: inputs prediction target ---
    model = NamesModelPallas(number_not_real=8, give_answers=False)
    inputs_pred_target, new_graph_data = model.forward(graph_data, ks[2])
    jax.block_until_ready(inputs_pred_target)
    jax.block_until_ready(new_graph_data['should_validate'])

    mask_np = np.asarray(new_graph_data['should_validate'])
    inp_np = np.asarray(inputs_pred_target)
    assert inp_np.shape == (N, L)
    assert np.all(inp_np[mask_np] == 0)
    assert np.array_equal(inp_np[~mask_np], tok_np[~mask_np])

    # --- give_answers=True path: outputs prediction target (same mask key) ---
    model_ans = NamesModelPallas(number_not_real=8, give_answers=True)
    outputs_pred_target, _ = model_ans.forward(graph_data, ks[2])
    jax.block_until_ready(outputs_pred_target)
    out_np = np.asarray(outputs_pred_target)
    assert np.all(out_np[~mask_np] == 0)
    assert np.array_equal(out_np[mask_np], tok_np[mask_np])

    # --- direct kernel test: ragged row grid (600 % 64 != 0), non-128 token
    # --- axis (200), small tile forcing a 10-step pipelined grid ---
    N2, L2 = 600, 200
    tok2 = jax.random.randint(ks[3], (N2, L2), 1, VOCAB, dtype=jnp.int32)
    mask2 = jax.random.bernoulli(ks[4], 0.3, (N2,))
    got = apply_names_mask(tok2, mask2, give_answers=False,
                           target_tile_bytes=64 << 10, force_pallas=True)
    jax.block_until_ready(got)
    ref = jnp.where(mask2[:, None], jnp.zeros_like(tok2), tok2)
    assert np.array_equal(np.asarray(got), np.asarray(ref))

    # --- tiny-input XLA fallback path ---
    N3, L3 = 40, 24
    tok3 = jax.random.randint(ks[5], (N3, L3), 1, VOCAB, dtype=jnp.int32)
    mask3 = jnp.zeros((N3,), dtype=bool).at[jnp.array([1, 7, 33])].set(True)
    got3 = apply_names_mask(tok3, mask3, give_answers=True)
    jax.block_until_ready(got3)
    ref3 = jnp.where(mask3[:, None], tok3, jnp.zeros_like(tok3))
    assert np.array_equal(np.asarray(got3), np.asarray(ref3))

    print("KERNEL_OK")
</pallas_src>

<mosaic_0001>
module attributes {stable_mosaic.version = 11 : i64} {
  func.func @_names_mask_kernel(%arg0: i32, %arg1: memref<1024x96xi32, #tpu.memory_space<vmem>>, %arg2: memref<1024x1xi8, #tpu.memory_space<vmem>>, %arg3: memref<1024x96xi32, #tpu.memory_space<vmem>>) attributes {dimension_semantics = [#tpu.dimension_semantics<parallel>], iteration_bounds = array<i64: 1>, scalar_prefetch = 0 : i64, scratch_operands = 0 : i64, tpu.core_type = #tpu.core_type<tc>, window_params = [{transform_indices = @transform_0, window_bounds = array<i64: 1024, 96>}, {transform_indices = @transform_1, window_bounds = array<i64: 1024, 1>}, {transform_indices = @transform_2, window_bounds = array<i64: 1024, 96>}]} {
    %c0 = arith.constant 0 : index
    %c0_0 = arith.constant 0 : index
    %0 = vector.load %arg1[%c0, %c0_0] : memref<1024x96xi32, #tpu.memory_space<vmem>>, vector<1024x96xi32>
    %c0_1 = arith.constant 0 : index
    %c0_2 = arith.constant 0 : index
    %1 = vector.load %arg2[%c0_1, %c0_2] : memref<1024x1xi8, #tpu.memory_space<vmem>>, vector<1024x1xi8>
    %2 = arith.extsi %1 : vector<1024x1xi8> to vector<1024x1xi32>
    %c0_i32 = arith.constant 0 : i32
    %3 = vector.broadcast %c0_i32 : i32 to vector<1024x1xi32>
    %4 = arith.cmpi sgt, %2, %3 : vector<1024x1xi32>
    %c0_i32_3 = arith.constant 0 : i32
    %5 = vector.broadcast %c0_i32_3 : i32 to vector<1024x96xi32>
    %6 = vector.shape_cast %4 : vector<1024x1xi1> to vector<1024x1xi1>
    %7 = vector.broadcast %6 : vector<1024x1xi1> to vector<1024x96xi1>
    %8 = arith.select %7, %5, %0 : vector<1024x96xi1>, vector<1024x96xi32>
    %c0_4 = arith.constant 0 : index
    %c0_5 = arith.constant 0 : index
    %9 = vector.load %arg3[%c0_4, %c0_5] : memref<1024x96xi32, #tpu.memory_space<vmem>>, vector<1024x96xi32>
    tpu.vector_store %arg3[%c0_4, %c0_5], %8 {strides = array<i32>} : memref<1024x96xi32, #tpu.memory_space<vmem>>, vector<1024x96xi32>,
    return
  }
  func.func @transform_0(%arg0: i32) -> (i32, i32) {
    %c0_i32 = arith.constant 0 : i32
    %c0_i32_0 = arith.constant 0 : i32
    return %arg0, %c0_i32 : i32, i32
  }
  func.func @transform_1(%arg0: i32) -> (i32, i32) {
    %c0_i32 = arith.constant 0 : i32
    %c0_i32_0 = arith.constant 0 : i32
    return %arg0, %c0_i32 : i32, i32
  }
  func.func @transform_2(%arg0: i32) -> (i32, i32) {
    %c0_i32 = arith.constant 0 : i32
    %c0_i32_0 = arith.constant 0 : i32
    return %arg0, %c0_i32 : i32, i32
  }
}

</mosaic_0001>

<llo_original>
// kernel: tpu_custom_call.1
$region0: #{tpu_custom_call.1}
  #allocation0 [shape = 'u32[]', space=smem, size = 0x4, offset = 0x4, fixed_abs, tag = 'smem constant byte address 0x4 - core index']
  #allocation1 [shape = 'u32[144,128]{1,0:T(1,128)}', space=vmem, size = 0x12000, scoped, tag = 'internal scratch']
  %s0 = inlined_call_operand.vmem [shape: s32[1024,96], index: 0, kind: input, shape index: {}]
  %s1 = inlined_call_operand.vmem [shape: s8[1024,1], index: 1, kind: input, shape index: {}]
  %s2 = inlined_call_operand.vmem [shape: s32[1024,96], index: 2, kind: output, shape index: {}]
  %s3 = sld [smem:[#allocation0]]
  $region18: #{tpu_custom_call.1} parent=0
    _
  %s5 = ssub.s32 1, %s3
  %s6 = scalar_select 0, %s5, %s3
  // Predicated region
  $region2: #{tpu_custom_call.1} parent=0 // pred_check
    _
  $region3: #{tpu_custom_call.1} parent=0 // pred_check_branch
    %8 = sbr.rel (0) target = $region5
  $region4: #{tpu_custom_call.1} parent=0 // pred_region
    _
  $region5: #{tpu_custom_call.1} parent=0 // pred_fallthru
    _
  // Predicated region
  $region6: #{tpu_custom_call.1} parent=0 // pred_check
    _
  $region7: #{tpu_custom_call.1} parent=0 // pred_check_branch
    %10 = sbr.rel (0) target = $region9
  $region8: #{tpu_custom_call.1} parent=0 // pred_region
    _
  $region9: #{tpu_custom_call.1} parent=0 // pred_fallthru
    _
  %v11 = vld [vmem:[%s0] sm:$0xff]
  %v12 = vld [vmem:[%s0 + $0x8] sm:$0xff]
  %v13 = vld [vmem:[%s0 + $0x10] sm:$0xff]
  %v14 = vld [vmem:[%s0 + $0x18] sm:$0xff]
  %v15 = vld [vmem:[%s0 + $0x20] sm:$0xff]
  %v16 = vld [vmem:[%s0 + $0x28] sm:$0xff]
  %v17 = vld [vmem:[%s0 + $0x30] sm:$0xff]
  %v18 = vld [vmem:[%s0 + $0x38] sm:$0xff]
  %v19 = vld [vmem:[%s0 + $0x40] sm:$0xff]
  %v20 = vld [vmem:[%s0 + $0x48] sm:$0xff]
  %v21 = vld [vmem:[%s0 + $0x50] sm:$0xff]
  %v22 = vld [vmem:[%s0 + $0x58] sm:$0xff]
  %v23 = vld [vmem:[%s0 + $0x60] sm:$0xff]
  %v24 = vld [vmem:[%s0 + $0x68] sm:$0xff]
  %v25 = vld [vmem:[%s0 + $0x70] sm:$0xff]
  %v26 = vld [vmem:[%s0 + $0x78] sm:$0xff]
  %v27 = vld [vmem:[%s0 + $0x80] sm:$0xff]
  %v28 = vld [vmem:[%s0 + $0x88] sm:$0xff]
  %v29 = vld [vmem:[%s0 + $0x90] sm:$0xff]
  %v30 = vld [vmem:[%s0 + $0x98] sm:$0xff]
  %v31 = vld [vmem:[%s0 + $0xa0] sm:$0xff]
  %v32 = vld [vmem:[%s0 + $0xa8] sm:$0xff]
  %v33 = vld [vmem:[%s0 + $0xb0] sm:$0xff]
  %v34 = vld [vmem:[%s0 + $0xb8] sm:$0xff]
  %v35 = vld [vmem:[%s0 + $0xc0] sm:$0xff]
  %v36 = vld [vmem:[%s0 + $0xc8] sm:$0xff]
  %v37 = vld [vmem:[%s0 + $0xd0] sm:$0xff]
  %v38 = vld [vmem:[%s0 + $0xd8] sm:$0xff]
  %v39 = vld [vmem:[%s0 + $0xe0] sm:$0xff]
  %v40 = vld [vmem:[%s0 + $0xe8] sm:$0xff]
  %v41 = vld [vmem:[%s0 + $0xf0] sm:$0xff]
  %v42 = vld [vmem:[%s0 + $0xf8] sm:$0xff]
  %v43 = vld [vmem:[%s0 + $0x100] sm:$0xff]
  %v44 = vld [vmem:[%s0 + $0x108] sm:$0xff]
  %v45 = vld [vmem:[%s0 + $0x110] sm:$0xff]
  %v46 = vld [vmem:[%s0 + $0x118] sm:$0xff]
  %v47 = vld [vmem:[%s0 + $0x120] sm:$0xff]
  %v48 = vld [vmem:[%s0 + $0x128] sm:$0xff]
  %v49 = vld [vmem:[%s0 + $0x130] sm:$0xff]
  %v50 = vld [vmem:[%s0 + $0x138] sm:$0xff]
  %v51 = vld [vmem:[%s0 + $0x140] sm:$0xff]
  %v52 = vld [vmem:[%s0 + $0x148] sm:$0xff]
  %v53 = vld [vmem:[%s0 + $0x150] sm:$0xff]
  %v54 = vld [vmem:[%s0 + $0x158] sm:$0xff]
  %v55 = vld [vmem:[%s0 + $0x160] sm:$0xff]
  %v56 = vld [vmem:[%s0 + $0x168] sm:$0xff]
  %v57 = vld [vmem:[%s0 + $0x170] sm:$0xff]
  %v58 = vld [vmem:[%s0 + $0x178] sm:$0xff]
  %v59 = vld [vmem:[%s0 + $0x180] sm:$0xff]
  %v60 = vld [vmem:[%s0 + $0x188] sm:$0xff]
  %v61 = vld [vmem:[%s0 + $0x190] sm:$0xff]
  %v62 = vld [vmem:[%s0 + $0x198] sm:$0xff]
  %v63 = vld [vmem:[%s0 + $0x1a0] sm:$0xff]
  %v64 = vld [vmem:[%s0 + $0x1a8] sm:$0xff]
  %v65 = vld [vmem:[%s0 + $0x1b0] sm:$0xff]
  %v66 = vld [vmem:[%s0 + $0x1b8] sm:$0xff]
  %v67 = vld [vmem:[%s0 + $0x1c0] sm:$0xff]
  %v68 = vld [vmem:[%s0 + $0x1c8] sm:$0xff]
  %v69 = vld [vmem:[%s0 + $0x1d0] sm:$0xff]
  %v70 = vld [vmem:[%s0 + $0x1d8] sm:$0xff]
  %v71 = vld [vmem:[%s0 + $0x1e0] sm:$0xff]
  %v72 = vld [vmem:[%s0 + $0x1e8] sm:$0xff]
  %v73 = vld [vmem:[%s0 + $0x1f0] sm:$0xff]
  %v74 = vld [vmem:[%s0 + $0x1f8] sm:$0xff]
  %v75 = vld [vmem:[%s0 + $0x200] sm:$0xff]
  %v76 = vld [vmem:[%s0 + $0x208] sm:$0xff]
  %v77 = vld [vmem:[%s0 + $0x210] sm:$0xff]
  %v78 = vld [vmem:[%s0 + $0x218] sm:$0xff]
  %v79 = vld [vmem:[%s0 + $0x220] sm:$0xff]
  %v80 = vld [vmem:[%s0 + $0x228] sm:$0xff]
  %v81 = vld [vmem:[%s0 + $0x230] sm:$0xff]
  %v82 = vld [vmem:[%s0 + $0x238] sm:$0xff]
  %v83 = vld [vmem:[%s0 + $0x240] sm:$0xff]
  %v84 = vld [vmem:[%s0 + $0x248] sm:$0xff]
  %v85 = vld [vmem:[%s0 + $0x250] sm:$0xff]
  %v86 = vld [vmem:[%s0 + $0x258] sm:$0xff]
  %v87 = vld [vmem:[%s0 + $0x260] sm:$0xff]
  %v88 = vld [vmem:[%s0 + $0x268] sm:$0xff]
  %v89 = vld [vmem:[%s0 + $0x270] sm:$0xff]
  %v90 = vld [vmem:[%s0 + $0x278] sm:$0xff]
  %v91 = vld [vmem:[%s0 + $0x280] sm:$0xff]
  %v92 = vld [vmem:[%s0 + $0x288] sm:$0xff]
  %v93 = vld [vmem:[%s0 + $0x290] sm:$0xff]
  %v94 = vld [vmem:[%s0 + $0x298] sm:$0xff]
  %v95 = vld [vmem:[%s0 + $0x2a0] sm:$0xff]
  %v96 = vld [vmem:[%s0 + $0x2a8] sm:$0xff]
  %v97 = vld [vmem:[%s0 + $0x2b0] sm:$0xff]
  %v98 = vld [vmem:[%s0 + $0x2b8] sm:$0xff]
  %v99 = vld [vmem:[%s0 + $0x2c0] sm:$0xff]
  %v100 = vld [vmem:[%s0 + $0x2c8] sm:$0xff]
  %v101 = vld [vmem:[%s0 + $0x2d0] sm:$0xff]
  %v102 = vld [vmem:[%s0 + $0x2d8] sm:$0xff]
  %v103 = vld [vmem:[%s0 + $0x2e0] sm:$0xff]
  %v104 = vld [vmem:[%s0 + $0x2e8] sm:$0xff]
  %v105 = vld [vmem:[%s0 + $0x2f0] sm:$0xff]
  %v106 = vld [vmem:[%s0 + $0x2f8] sm:$0xff]
  %v107 = vld [vmem:[%s0 + $0x300] sm:$0xff]
  %v108 = vld [vmem:[%s0 + $0x308] sm:$0xff]
  %v109 = vld [vmem:[%s0 + $0x310] sm:$0xff]
  %v110 = vld [vmem:[%s0 + $0x318] sm:$0xff]
  %v111 = vld [vmem:[%s0 + $0x320] sm:$0xff]
  %v112 = vld [vmem:[%s0 + $0x328] sm:$0xff]
  %v113 = vld [vmem:[%s0 + $0x330] sm:$0xff]
  %v114 = vld [vmem:[%s0 + $0x338] sm:$0xff]
  %v115 = vld [vmem:[%s0 + $0x340] sm:$0xff]
  %v116 = vld [vmem:[%s0 + $0x348] sm:$0xff]
  %v117 = vld [vmem:[%s0 + $0x350] sm:$0xff]
  %v118 = vld [vmem:[%s0 + $0x358] sm:$0xff]
  %v119 = vld [vmem:[%s0 + $0x360] sm:$0xff]
  %v120 = vld [vmem:[%s0 + $0x368] sm:$0xff]
  %v121 = vld [vmem:[%s0 + $0x370] sm:$0xff]
  %v122 = vld [vmem:[%s0 + $0x378] sm:$0xff]
  %v123 = vld [vmem:[%s0 + $0x380] sm:$0xff]
  %v124 = vld [vmem:[%s0 + $0x388] sm:$0xff]
  %v125 = vld [vmem:[%s0 + $0x390] sm:$0xff]
  %v126 = vld [vmem:[%s0 + $0x398] sm:$0xff]
  %v127 = vld [vmem:[%s0 + $0x3a0] sm:$0xff]
  %v128 = vld [vmem:[%s0 + $0x3a8] sm:$0xff]
  %v129 = vld [vmem:[%s0 + $0x3b0] sm:$0xff]
  %v130 = vld [vmem:[%s0 + $0x3b8] sm:$0xff]
  %v131 = vld [vmem:[%s0 + $0x3c0] sm:$0xff]
  %v132 = vld [vmem:[%s0 + $0x3c8] sm:$0xff]
  %v133 = vld [vmem:[%s0 + $0x3d0] sm:$0xff]
  %v134 = vld [vmem:[%s0 + $0x3d8] sm:$0xff]
  %v135 = vld [vmem:[%s0 + $0x3e0] sm:$0xff]
  %v136 = vld [vmem:[%s0 + $0x3e8] sm:$0xff]
  %v137 = vld [vmem:[%s0 + $0x3f0] sm:$0xff]
  %v138 = vld [vmem:[%s0 + $0x3f8] sm:$0xff]
  %v139 = vld [vmem:[%s1] sm:$0x3]
  %v140 = vld [vmem:[%s1 + $0x2] sm:$0x3]
  %v141 = vld [vmem:[%s1 + $0x4] sm:$0x3]
  %v142 = vld [vmem:[%s1 + $0x6] sm:$0x3]
  %v143 = vld [vmem:[%s1 + $0x8] sm:$0x3]
  %v144 = vld [vmem:[%s1 + $0xa] sm:$0x3]
  %v145 = vld [vmem:[%s1 + $0xc] sm:$0x3]
  %v146 = vld [vmem:[%s1 + $0xe] sm:$0x3]
  %v147 = vld [vmem:[%s1 + $0x10] sm:$0x3]
  %v148 = vld [vmem:[%s1 + $0x12] sm:$0x3]
  %v149 = vld [vmem:[%s1 + $0x14] sm:$0x3]
  %v150 = vld [vmem:[%s1 + $0x16] sm:$0x3]
  %v151 = vld [vmem:[%s1 + $0x18] sm:$0x3]
  %v152 = vld [vmem:[%s1 + $0x1a] sm:$0x3]
  %v153 = vld [vmem:[%s1 + $0x1c] sm:$0x3]
  %v154 = vld [vmem:[%s1 + $0x1e] sm:$0x3]
  %v155 = vld [vmem:[%s1 + $0x20] sm:$0x3]
  %v156 = vld [vmem:[%s1 + $0x22] sm:$0x3]
  %v157 = vld [vmem:[%s1 + $0x24] sm:$0x3]
  %v158 = vld [vmem:[%s1 + $0x26] sm:$0x3]
  %v159 = vld [vmem:[%s1 + $0x28] sm:$0x3]
  %v160 = vld [vmem:[%s1 + $0x2a] sm:$0x3]
  %v161 = vld [vmem:[%s1 + $0x2c] sm:$0x3]
  %v162 = vld [vmem:[%s1 + $0x2e] sm:$0x3]
  %v163 = vld [vmem:[%s1 + $0x30] sm:$0x3]
  %v164 = vld [vmem:[%s1 + $0x32] sm:$0x3]
  %v165 = vld [vmem:[%s1 + $0x34] sm:$0x3]
  %v166 = vld [vmem:[%s1 + $0x36] sm:$0x3]
  %v167 = vld [vmem:[%s1 + $0x38] sm:$0x3]
  %v168 = vld [vmem:[%s1 + $0x3a] sm:$0x3]
  %v169 = vld [vmem:[%s1 + $0x3c] sm:$0x3]
  %v170 = vld [vmem:[%s1 + $0x3e] sm:$0x3]
  %v171 = vld [vmem:[%s1 + $0x40] sm:$0x3]
  %v172 = vld [vmem:[%s1 + $0x42] sm:$0x3]
  %v173 = vld [vmem:[%s1 + $0x44] sm:$0x3]
  %v174 = vld [vmem:[%s1 + $0x46] sm:$0x3]
  %v175 = vld [vmem:[%s1 + $0x48] sm:$0x3]
  %v176 = vld [vmem:[%s1 + $0x4a] sm:$0x3]
  %v177 = vld [vmem:[%s1 + $0x4c] sm:$0x3]
  %v178 = vld [vmem:[%s1 + $0x4e] sm:$0x3]
  %v179 = vld [vmem:[%s1 + $0x50] sm:$0x3]
  %v180 = vld [vmem:[%s1 + $0x52] sm:$0x3]
  %v181 = vld [vmem:[%s1 + $0x54] sm:$0x3]
  %v182 = vld [vmem:[%s1 + $0x56] sm:$0x3]
  %v183 = vld [vmem:[%s1 + $0x58] sm:$0x3]
  %v184 = vld [vmem:[%s1 + $0x5a] sm:$0x3]
  %v185 = vld [vmem:[%s1 + $0x5c] sm:$0x3]
  %v186 = vld [vmem:[%s1 + $0x5e] sm:$0x3]
  %v187 = vld [vmem:[%s1 + $0x60] sm:$0x3]
  %v188 = vld [vmem:[%s1 + $0x62] sm:$0x3]
  %v189 = vld [vmem:[%s1 + $0x64] sm:$0x3]
  %v190 = vld [vmem:[%s1 + $0x66] sm:$0x3]
  %v191 = vld [vmem:[%s1 + $0x68] sm:$0x3]
  %v192 = vld [vmem:[%s1 + $0x6a] sm:$0x3]
  %v193 = vld [vmem:[%s1 + $0x6c] sm:$0x3]
  %v194 = vld [vmem:[%s1 + $0x6e] sm:$0x3]
  %v195 = vld [vmem:[%s1 + $0x70] sm:$0x3]
  %v196 = vld [vmem:[%s1 + $0x72] sm:$0x3]
  %v197 = vld [vmem:[%s1 + $0x74] sm:$0x3]
  %v198 = vld [vmem:[%s1 + $0x76] sm:$0x3]
  %v199 = vld [vmem:[%s1 + $0x78] sm:$0x3]
  %v200 = vld [vmem:[%s1 + $0x7a] sm:$0x3]
  %v201 = vld [vmem:[%s1 + $0x7c] sm:$0x3]
  %v202 = vld [vmem:[%s1 + $0x7e] sm:$0x3]
  %v203 = vld [vmem:[%s1 + $0x80] sm:$0x3]
  %v204 = vld [vmem:[%s1 + $0x82] sm:$0x3]
  %v205 = vld [vmem:[%s1 + $0x84] sm:$0x3]
  %v206 = vld [vmem:[%s1 + $0x86] sm:$0x3]
  %v207 = vld [vmem:[%s1 + $0x88] sm:$0x3]
  %v208 = vld [vmem:[%s1 + $0x8a] sm:$0x3]
  %v209 = vld [vmem:[%s1 + $0x8c] sm:$0x3]
  %v210 = vld [vmem:[%s1 + $0x8e] sm:$0x3]
  %v211 = vld [vmem:[%s1 + $0x90] sm:$0x3]
  %v212 = vld [vmem:[%s1 + $0x92] sm:$0x3]
  %v213 = vld [vmem:[%s1 + $0x94] sm:$0x3]
  %v214 = vld [vmem:[%s1 + $0x96] sm:$0x3]
  %v215 = vld [vmem:[%s1 + $0x98] sm:$0x3]
  %v216 = vld [vmem:[%s1 + $0x9a] sm:$0x3]
  %v217 = vld [vmem:[%s1 + $0x9c] sm:$0x3]
  %v218 = vld [vmem:[%s1 + $0x9e] sm:$0x3]
  %v219 = vld [vmem:[%s1 + $0xa0] sm:$0x3]
  %v220 = vld [vmem:[%s1 + $0xa2] sm:$0x3]
  %v221 = vld [vmem:[%s1 + $0xa4] sm:$0x3]
  %v222 = vld [vmem:[%s1 + $0xa6] sm:$0x3]
  %v223 = vld [vmem:[%s1 + $0xa8] sm:$0x3]
  %v224 = vld [vmem:[%s1 + $0xaa] sm:$0x3]
  %v225 = vld [vmem:[%s1 + $0xac] sm:$0x3]
  %v226 = vld [vmem:[%s1 + $0xae] sm:$0x3]
  %v227 = vld [vmem:[%s1 + $0xb0] sm:$0x3]
  %v228 = vld [vmem:[%s1 + $0xb2] sm:$0x3]
  %v229 = vld [vmem:[%s1 + $0xb4] sm:$0x3]
  %v230 = vld [vmem:[%s1 + $0xb6] sm:$0x3]
  %v231 = vld [vmem:[%s1 + $0xb8] sm:$0x3]
  %v232 = vld [vmem:[%s1 + $0xba] sm:$0x3]
  %v233 = vld [vmem:[%s1 + $0xbc] sm:$0x3]
  %v234 = vld [vmem:[%s1 + $0xbe] sm:$0x3]
  %v235 = vld [vmem:[%s1 + $0xc0] sm:$0x3]
  %v236 = vld [vmem:[%s1 + $0xc2] sm:$0x3]
  %v237 = vld [vmem:[%s1 + $0xc4] sm:$0x3]
  %v238 = vld [vmem:[%s1 + $0xc6] sm:$0x3]
  %v239 = vld [vmem:[%s1 + $0xc8] sm:$0x3]
  %v240 = vld [vmem:[%s1 + $0xca] sm:$0x3]
  %v241 = vld [vmem:[%s1 + $0xcc] sm:$0x3]
  %v242 = vld [vmem:[%s1 + $0xce] sm:$0x3]
  %v243 = vld [vmem:[%s1 + $0xd0] sm:$0x3]
  %v244 = vld [vmem:[%s1 + $0xd2] sm:$0x3]
  %v245 = vld [vmem:[%s1 + $0xd4] sm:$0x3]
  %v246 = vld [vmem:[%s1 + $0xd6] sm:$0x3]
  %v247 = vld [vmem:[%s1 + $0xd8] sm:$0x3]
  %v248 = vld [vmem:[%s1 + $0xda] sm:$0x3]
  %v249 = vld [vmem:[%s1 + $0xdc] sm:$0x3]
  %v250 = vld [vmem:[%s1 + $0xde] sm:$0x3]
  %v251 = vld [vmem:[%s1 + $0xe0] sm:$0x3]
  %v252 = vld [vmem:[%s1 + $0xe2] sm:$0x3]
  %v253 = vld [vmem:[%s1 + $0xe4] sm:$0x3]
  %v254 = vld [vmem:[%s1 + $0xe6] sm:$0x3]
  %v255 = vld [vmem:[%s1 + $0xe8] sm:$0x3]
  %v256 = vld [vmem:[%s1 + $0xea] sm:$0x3]
  %v257 = vld [vmem:[%s1 + $0xec] sm:$0x3]
  %v258 = vld [vmem:[%s1 + $0xee] sm:$0x3]
  %v259 = vld [vmem:[%s1 + $0xf0] sm:$0x3]
  %v260 = vld [vmem:[%s1 + $0xf2] sm:$0x3]
  %v261 = vld [vmem:[%s1 + $0xf4] sm:$0x3]
  %v262 = vld [vmem:[%s1 + $0xf6] sm:$0x3]
  %v263 = vld [vmem:[%s1 + $0xf8] sm:$0x3]
  %v264 = vld [vmem:[%s1 + $0xfa] sm:$0x3]
  %v265 = vld [vmem:[%s1 + $0xfc] sm:$0x3]
  %v266 = vld [vmem:[%s1 + $0xfe] sm:$0x3]
  %v267 = vunpack.c.0.s8 %v139
  %v268 = vunpack.c.0.s8 %v140
  %v269 = vunpack.c.0.s8 %v141
  %v270 = vunpack.c.0.s8 %v142
  %v271 = vunpack.c.0.s8 %v143
  %v272 = vunpack.c.0.s8 %v144
  %v273 = vunpack.c.0.s8 %v145
  %v274 = vunpack.c.0.s8 %v146
  %v275 = vunpack.c.0.s8 %v147
  %v276 = vunpack.c.0.s8 %v148
  %v277 = vunpack.c.0.s8 %v149
  %v278 = vunpack.c.0.s8 %v150
  %v279 = vunpack.c.0.s8 %v151
  %v280 = vunpack.c.0.s8 %v152
  %v281 = vunpack.c.0.s8 %v153
  %v282 = vunpack.c.0.s8 %v154
  %v283 = vunpack.c.0.s8 %v155
  %v284 = vunpack.c.0.s8 %v156
  %v285 = vunpack.c.0.s8 %v157
  %v286 = vunpack.c.0.s8 %v158
  %v287 = vunpack.c.0.s8 %v159
  %v288 = vunpack.c.0.s8 %v160
  %v289 = vunpack.c.0.s8 %v161
  %v290 = vunpack.c.0.s8 %v162
  %v291 = vunpack.c.0.s8 %v163
  %v292 = vunpack.c.0.s8 %v164
  %v293 = vunpack.c.0.s8 %v165
  %v294 = vunpack.c.0.s8 %v166
  %v295 = vunpack.c.0.s8 %v167
  %v296 = vunpack.c.0.s8 %v168
  %v297 = vunpack.c.0.s8 %v169
  %v298 = vunpack.c.0.s8 %v170
  %v299 = vunpack.c.0.s8 %v171
  %v300 = vunpack.c.0.s8 %v172
  %v301 = vunpack.c.0.s8 %v173
  %v302 = vunpack.c.0.s8 %v174
  %v303 = vunpack.c.0.s8 %v175
  %v304 = vunpack.c.0.s8 %v176
  %v305 = vunpack.c.0.s8 %v177
  %v306 = vunpack.c.0.s8 %v178
  %v307 = vunpack.c.0.s8 %v179
  %v308 = vunpack.c.0.s8 %v180
  %v309 = vunpack.c.0.s8 %v181
  %v310 = vunpack.c.0.s8 %v182
  %v311 = vunpack.c.0.s8 %v183
  %v312 = vunpack.c.0.s8 %v184
  %v313 = vunpack.c.0.s8 %v185
  %v314 = vunpack.c.0.s8 %v186
  %v315 = vunpack.c.0.s8 %v187
  %v316 = vunpack.c.0.s8 %v188
  %v317 = vunpack.c.0.s8 %v189
  %v318 = vunpack.c.0.s8 %v190
  %v319 = vunpack.c.0.s8 %v191
  %v320 = vunpack.c.0.s8 %v192
  %v321 = vunpack.c.0.s8 %v193
  %v322 = vunpack.c.0.s8 %v194
  %v323 = vunpack.c.0.s8 %v195
  %v324 = vunpack.c.0.s8 %v196
  %v325 = vunpack.c.0.s8 %v197
  %v326 = vunpack.c.0.s8 %v198
  %v327 = vunpack.c.0.s8 %v199
  %v328 = vunpack.c.0.s8 %v200
  %v329 = vunpack.c.0.s8 %v201
  %v330 = vunpack.c.0.s8 %v202
  %v331 = vunpack.c.0.s8 %v203
  %v332 = vunpack.c.0.s8 %v204
  %v333 = vunpack.c.0.s8 %v205
  %v334 = vunpack.c.0.s8 %v206
  %v335 = vunpack.c.0.s8 %v207
  %v336 = vunpack.c.0.s8 %v208
  %v337 = vunpack.c.0.s8 %v209
  %v338 = vunpack.c.0.s8 %v210
  %v339 = vunpack.c.0.s8 %v211
  %v340 = vunpack.c.0.s8 %v212
  %v341 = vunpack.c.0.s8 %v213
  %v342 = vunpack.c.0.s8 %v214
  %v343 = vunpack.c.0.s8 %v215
  %v344 = vunpack.c.0.s8 %v216
  %v345 = vunpack.c.0.s8 %v217
  %v346 = vunpack.c.0.s8 %v218
  %v347 = vunpack.c.0.s8 %v219
  %v348 = vunpack.c.0.s8 %v220
  %v349 = vunpack.c.0.s8 %v221
  %v350 = vunpack.c.0.s8 %v222
  %v351 = vunpack.c.0.s8 %v223
  %v352 = vunpack.c.0.s8 %v224
  %v353 = vunpack.c.0.s8 %v225
  %v354 = vunpack.c.0.s8 %v226
  %v355 = vunpack.c.0.s8 %v227
  %v356 = vunpack.c.0.s8 %v228
  %v357 = vunpack.c.0.s8 %v229
  %v358 = vunpack.c.0.s8 %v230
  %v359 = vunpack.c.0.s8 %v231
  %v360 = vunpack.c.0.s8 %v232
  %v361 = vunpack.c.0.s8 %v233
  %v362 = vunpack.c.0.s8 %v234
  %v363 = vunpack.c.0.s8 %v235
  %v364 = vunpack.c.0.s8 %v236
  %v365 = vunpack.c.0.s8 %v237
  %v366 = vunpack.c.0.s8 %v238
  %v367 = vunpack.c.0.s8 %v239
  %v368 = vunpack.c.0.s8 %v240
  %v369 = vunpack.c.0.s8 %v241
  %v370 = vunpack.c.0.s8 %v242
  %v371 = vunpack.c.0.s8 %v243
  %v372 = vunpack.c.0.s8 %v244
  %v373 = vunpack.c.0.s8 %v245
  %v374 = vunpack.c.0.s8 %v246
  %v375 = vunpack.c.0.s8 %v247
  %v376 = vunpack.c.0.s8 %v248
  %v377 = vunpack.c.0.s8 %v249
  %v378 = vunpack.c.0.s8 %v250
  %v379 = vunpack.c.0.s8 %v251
  %v380 = vunpack.c.0.s8 %v252
  %v381 = vunpack.c.0.s8 %v253
  %v382 = vunpack.c.0.s8 %v254
  %v383 = vunpack.c.0.s8 %v255
  %v384 = vunpack.c.0.s8 %v256
  %v385 = vunpack.c.0.s8 %v257
  %v386 = vunpack.c.0.s8 %v258
  %v387 = vunpack.c.0.s8 %v259
  %v388 = vunpack.c.0.s8 %v260
  %v389 = vunpack.c.0.s8 %v261
  %v390 = vunpack.c.0.s8 %v262
  %v391 = vunpack.c.0.s8 %v263
  %v392 = vunpack.c.0.s8 %v264
  %v393 = vunpack.c.0.s8 %v265
  %v394 = vunpack.c.0.s8 %v266
  %vm395 = vcmp.gt.s32.totalorder %v267, 0
  %vm396 = vcmp.gt.s32.totalorder %v268, 0
  %vm397 = vcmp.gt.s32.totalorder %v269, 0
  %vm398 = vcmp.gt.s32.totalorder %v270, 0
  %vm399 = vcmp.gt.s32.totalorder %v271, 0
  %vm400 = vcmp.gt.s32.totalorder %v272, 0
  %vm401 = vcmp.gt.s32.totalorder %v273, 0
  %vm402 = vcmp.gt.s32.totalorder %v274, 0
  %vm403 = vcmp.gt.s32.totalorder %v275, 0
  %vm404 = vcmp.gt.s32.totalorder %v276, 0
  %vm405 = vcmp.gt.s32.totalorder %v277, 0
  %vm406 = vcmp.gt.s32.totalorder %v278, 0
  %vm407 = vcmp.gt.s32.totalorder %v279, 0
  %vm408 = vcmp.gt.s32.totalorder %v280, 0
  %vm409 = vcmp.gt.s32.totalorder %v281, 0
  %vm410 = vcmp.gt.s32.totalorder %v282, 0
  %vm411 = vcmp.gt.s32.totalorder %v283, 0
  %vm412 = vcmp.gt.s32.totalorder %v284, 0
  %vm413 = vcmp.gt.s32.totalorder %v285, 0
  %vm414 = vcmp.gt.s32.totalorder %v286, 0
  %vm415 = vcmp.gt.s32.totalorder %v287, 0
  %vm416 = vcmp.gt.s32.totalorder %v288, 0
  %vm417 = vcmp.gt.s32.totalorder %v289, 0
  %vm418 = vcmp.gt.s32.totalorder %v290, 0
  %vm419 = vcmp.gt.s32.totalorder %v291, 0
  %vm420 = vcmp.gt.s32.totalorder %v292, 0
  %vm421 = vcmp.gt.s32.totalorder %v293, 0
  %vm422 = vcmp.gt.s32.totalorder %v294, 0
  %vm423 = vcmp.gt.s32.totalorder %v295, 0
  %vm424 = vcmp.gt.s32.totalorder %v296, 0
  %vm425 = vcmp.gt.s32.totalorder %v297, 0
  %vm426 = vcmp.gt.s32.totalorder %v298, 0
  %vm427 = vcmp.gt.s32.totalorder %v299, 0
  %vm428 = vcmp.gt.s32.totalorder %v300, 0
  %vm429 = vcmp.gt.s32.totalorder %v301, 0
  %vm430 = vcmp.gt.s32.totalorder %v302, 0
  %vm431 = vcmp.gt.s32.totalorder %v303, 0
  %vm432 = vcmp.gt.s32.totalorder %v304, 0
  %vm433 = vcmp.gt.s32.totalorder %v305, 0
  %vm434 = vcmp.gt.s32.totalorder %v306, 0
  %vm435 = vcmp.gt.s32.totalorder %v307, 0
  %vm436 = vcmp.gt.s32.totalorder %v308, 0
  %vm437 = vcmp.gt.s32.totalorder %v309, 0
  %vm438 = vcmp.gt.s32.totalorder %v310, 0
  %vm439 = vcmp.gt.s32.totalorder %v311, 0
  %vm440 = vcmp.gt.s32.totalorder %v312, 0
  %vm441 = vcmp.gt.s32.totalorder %v313, 0
  %vm442 = vcmp.gt.s32.totalorder %v314, 0
  %vm443 = vcmp.gt.s32.totalorder %v315, 0
  %vm444 = vcmp.gt.s32.totalorder %v316, 0
  %vm445 = vcmp.gt.s32.totalorder %v317, 0
  %vm446 = vcmp.gt.s32.totalorder %v318, 0
  %vm447 = vcmp.gt.s32.totalorder %v319, 0
  %vm448 = vcmp.gt.s32.totalorder %v320, 0
  %vm449 = vcmp.gt.s32.totalorder %v321, 0
  %vm450 = vcmp.gt.s32.totalorder %v322, 0
  %vm451 = vcmp.gt.s32.totalorder %v323, 0
  %vm452 = vcmp.gt.s32.totalorder %v324, 0
  %vm453 = vcmp.gt.s32.totalorder %v325, 0
  %vm454 = vcmp.gt.s32.totalorder %v326, 0
  %vm455 = vcmp.gt.s32.totalorder %v327, 0
  %vm456 = vcmp.gt.s32.totalorder %v328, 0
  %vm457 = vcmp.gt.s32.totalorder %v329, 0
  %vm458 = vcmp.gt.s32.totalorder %v330, 0
  %vm459 = vcmp.gt.s32.totalorder %v331, 0
  %vm460 = vcmp.gt.s32.totalorder %v332, 0
  %vm461 = vcmp.gt.s32.totalorder %v333, 0
  %vm462 = vcmp.gt.s32.totalorder %v334, 0
  %vm463 = vcmp.gt.s32.totalorder %v335, 0
  %vm464 = vcmp.gt.s32.totalorder %v336, 0
  %vm465 = vcmp.gt.s32.totalorder %v337, 0
  %vm466 = vcmp.gt.s32.totalorder %v338, 0
  %vm467 = vcmp.gt.s32.totalorder %v339, 0
  %vm468 = vcmp.gt.s32.totalorder %v340, 0
  %vm469 = vcmp.gt.s32.totalorder %v341, 0
  %vm470 = vcmp.gt.s32.totalorder %v342, 0
  %vm471 = vcmp.gt.s32.totalorder %v343, 0
  %vm472 = vcmp.gt.s32.totalorder %v344, 0
  %vm473 = vcmp.gt.s32.totalorder %v345, 0
  %vm474 = vcmp.gt.s32.totalorder %v346, 0
  %vm475 = vcmp.gt.s32.totalorder %v347, 0
  %vm476 = vcmp.gt.s32.totalorder %v348, 0
  %vm477 = vcmp.gt.s32.totalorder %v349, 0
  %vm478 = vcmp.gt.s32.totalorder %v350, 0
  %vm479 = vcmp.gt.s32.totalorder %v351, 0
  %vm480 = vcmp.gt.s32.totalorder %v352, 0
  %vm481 = vcmp.gt.s32.totalorder %v353, 0
  %vm482 = vcmp.gt.s32.totalorder %v354, 0
  %vm483 = vcmp.gt.s32.totalorder %v355, 0
  %vm484 = vcmp.gt.s32.totalorder %v356, 0
  %vm485 = vcmp.gt.s32.totalorder %v357, 0
  %vm486 = vcmp.gt.s32.totalorder %v358, 0
  %vm487 = vcmp.gt.s32.totalorder %v359, 0
  %vm488 = vcmp.gt.s32.totalorder %v360, 0
  %vm489 = vcmp.gt.s32.totalorder %v361, 0
  %vm490 = vcmp.gt.s32.totalorder %v362, 0
  %vm491 = vcmp.gt.s32.totalorder %v363, 0
  %vm492 = vcmp.gt.s32.totalorder %v364, 0
  %vm493 = vcmp.gt.s32.totalorder %v365, 0
  %vm494 = vcmp.gt.s32.totalorder %v366, 0
  %vm495 = vcmp.gt.s32.totalorder %v367, 0
  %vm496 = vcmp.gt.s32.totalorder %v368, 0
  %vm497 = vcmp.gt.s32.totalorder %v369, 0
  %vm498 = vcmp.gt.s32.totalorder %v370, 0
  %vm499 = vcmp.gt.s32.totalorder %v371, 0
  %vm500 = vcmp.gt.s32.totalorder %v372, 0
  %vm501 = vcmp.gt.s32.totalorder %v373, 0
  %vm502 = vcmp.gt.s32.totalorder %v374, 0
  %vm503 = vcmp.gt.s32.totalorder %v375, 0
  %vm504 = vcmp.gt.s32.totalorder %v376, 0
  %vm505 = vcmp.gt.s32.totalorder %v377, 0
  %vm506 = vcmp.gt.s32.totalorder %v378, 0
  %vm507 = vcmp.gt.s32.totalorder %v379, 0
  %vm508 = vcmp.gt.s32.totalorder %v380, 0
  %vm509 = vcmp.gt.s32.totalorder %v381, 0
  %vm510 = vcmp.gt.s32.totalorder %v382, 0
  %vm511 = vcmp.gt.s32.totalorder %v383, 0
  %vm512 = vcmp.gt.s32.totalorder %v384, 0
  %vm513 = vcmp.gt.s32.totalorder %v385, 0
  %vm514 = vcmp.gt.s32.totalorder %v386, 0
  %vm515 = vcmp.gt.s32.totalorder %v387, 0
  %vm516 = vcmp.gt.s32.totalorder %v388, 0
  %vm517 = vcmp.gt.s32.totalorder %v389, 0
  %vm518 = vcmp.gt.s32.totalorder %v390, 0
  %vm519 = vcmp.gt.s32.totalorder %v391, 0
  %vm520 = vcmp.gt.s32.totalorder %v392, 0
  %vm521 = vcmp.gt.s32.totalorder %v393, 0
  %vm522 = vcmp.gt.s32.totalorder %v394, 0
  %v523 = vsel %vm395, 1, 0
  %v524 = vsel %vm396, 1, 0
  %v525 = vsel %vm397, 1, 0
  %v526 = vsel %vm398, 1, 0
  %v527 = vsel %vm399, 1, 0
  %v528 = vsel %vm400, 1, 0
  %v529 = vsel %vm401, 1, 0
  %v530 = vsel %vm402, 1, 0
  %v531 = vsel %vm403, 1, 0
  %v532 = vsel %vm404, 1, 0
  %v533 = vsel %vm405, 1, 0
  %v534 = vsel %vm406, 1, 0
  %v535 = vsel %vm407, 1, 0
  %v536 = vsel %vm408, 1, 0
  %v537 = vsel %vm409, 1, 0
  %v538 = vsel %vm410, 1, 0
  %v539 = vsel %vm411, 1, 0
  %v540 = vsel %vm412, 1, 0
  %v541 = vsel %vm413, 1, 0
  %v542 = vsel %vm414, 1, 0
  %v543 = vsel %vm415, 1, 0
  %v544 = vsel %vm416, 1, 0
  %v545 = vsel %vm417, 1, 0
  %v546 = vsel %vm418, 1, 0
  %v547 = vsel %vm419, 1, 0
  %v548 = vsel %vm420, 1, 0
  %v549 = vsel %vm421, 1, 0
  %v550 = vsel %vm422, 1, 0
  %v551 = vsel %vm423, 1, 0
  %v552 = vsel %vm424, 1, 0
  %v553 = vsel %vm425, 1, 0
  %v554 = vsel %vm426, 1, 0
  %v555 = vsel %vm427, 1, 0
  %v556 = vsel %vm428, 1, 0
  %v557 = vsel %vm429, 1, 0
  %v558 = vsel %vm430, 1, 0
  %v559 = vsel %vm431, 1, 0
  %v560 = vsel %vm432, 1, 0
  %v561 = vsel %vm433, 1, 0
  %v562 = vsel %vm434, 1, 0
  %v563 = vsel %vm435, 1, 0
  %v564 = vsel %vm436, 1, 0
  %v565 = vsel %vm437, 1, 0
  %v566 = vsel %vm438, 1, 0
  %v567 = vsel %vm439, 1, 0
  %v568 = vsel %vm440, 1, 0
  %v569 = vsel %vm441, 1, 0
  %v570 = vsel %vm442, 1, 0
  %v571 = vsel %vm443, 1, 0
  %v572 = vsel %vm444, 1, 0
  %v573 = vsel %vm445, 1, 0
  %v574 = vsel %vm446, 1, 0
  %v575 = vsel %vm447, 1, 0
  %v576 = vsel %vm448, 1, 0
  %v577 = vsel %vm449, 1, 0
  %v578 = vsel %vm450, 1, 0
  %v579 = vsel %vm451, 1, 0
  %v580 = vsel %vm452, 1, 0
  %v581 = vsel %vm453, 1, 0
  %v582 = vsel %vm454, 1, 0
  %v583 = vsel %vm455, 1, 0
  %v584 = vsel %vm456, 1, 0
  %v585 = vsel %vm457, 1, 0
  %v586 = vsel %vm458, 1, 0
  %v587 = vsel %vm459, 1, 0
  %v588 = vsel %vm460, 1, 0
  %v589 = vsel %vm461, 1, 0
  %v590 = vsel %vm462, 1, 0
  %v591 = vsel %vm463, 1, 0
  %v592 = vsel %vm464, 1, 0
  %v593 = vsel %vm465, 1, 0
  %v594 = vsel %vm466, 1, 0
  %v595 = vsel %vm467, 1, 0
  %v596 = vsel %vm468, 1, 0
  %v597 = vsel %vm469, 1, 0
  %v598 = vsel %vm470, 1, 0
  %v599 = vsel %vm471, 1, 0
  %v600 = vsel %vm472, 1, 0
  %v601 = vsel %vm473, 1, 0
  %v602 = vsel %vm474, 1, 0
  %v603 = vsel %vm475, 1, 0
  %v604 = vsel %vm476, 1, 0
  %v605 = vsel %vm477, 1, 0
  %v606 = vsel %vm478, 1, 0
  %v607 = vsel %vm479, 1, 0
  %v608 = vsel %vm480, 1, 0
  %v609 = vsel %vm481, 1, 0
  %v610 = vsel %vm482, 1, 0
  %v611 = vsel %vm483, 1, 0
  %v612 = vsel %vm484, 1, 0
  %v613 = vsel %vm485, 1, 0
  %v614 = vsel %vm486, 1, 0
  %v615 = vsel %vm487, 1, 0
  %v616 = vsel %vm488, 1, 0
  %v617 = vsel %vm489, 1, 0
  %v618 = vsel %vm490, 1, 0
  %v619 = vsel %vm491, 1, 0
  %v620 = vsel %vm492, 1, 0
  %v621 = vsel %vm493, 1, 0
  %v622 = vsel %vm494, 1, 0
  %v623 = vsel %vm495, 1, 0
  %v624 = vsel %vm496, 1, 0
  %v625 = vsel %vm497, 1, 0
  %v626 = vsel %vm498, 1, 0
  %v627 = vsel %vm499, 1, 0
  %v628 = vsel %vm500, 1, 0
  %v629 = vsel %vm501, 1, 0
  %v630 = vsel %vm502, 1, 0
  %v631 = vsel %vm503, 1, 0
  %v632 = vsel %vm504, 1, 0
  %v633 = vsel %vm505, 1, 0
  %v634 = vsel %vm506, 1, 0
  %v635 = vsel %vm507, 1, 0
  %v636 = vsel %vm508, 1, 0
  %v637 = vsel %vm509, 1, 0
  %v638 = vsel %vm510, 1, 0
  %v639 = vsel %vm511, 1, 0
  %v640 = vsel %vm512, 1, 0
  %v641 = vsel %vm513, 1, 0
  %v642 = vsel %vm514, 1, 0
  %v643 = vsel %vm515, 1, 0
  %v644 = vsel %vm516, 1, 0
  %v645 = vsel %vm517, 1, 0
  %v646 = vsel %vm518, 1, 0
  %v647 = vsel %vm519, 1, 0
  %v648 = vsel %vm520, 1, 0
  %v649 = vsel %vm521, 1, 0
  %v650 = vsel %vm522, 1, 0
  %651 = vset.pattern.permute.xlu0 0
  %652 = vperm.xlu0 %651, %v523
  %v653 = vpop.permute.xlu0 %652
  %654 = vset.pattern.permute.xlu0 0
  %655 = vperm.xlu0 %654, %v524
  %v656 = vpop.permute.xlu0 %655
  %657 = vset.pattern.permute.xlu0 0
  %658 = vperm.xlu0 %657, %v525
  %v659 = vpop.permute.xlu0 %658
  %660 = vset.pattern.permute.xlu0 0
  %661 = vperm.xlu0 %660, %v526
  %v662 = vpop.permute.xlu0 %661
  %663 = vset.pattern.permute.xlu0 0
  %664 = vperm.xlu0 %663, %v527
  %v665 = vpop.permute.xlu0 %664
  %666 = vset.pattern.permute.xlu0 0
  %667 = vperm.xlu0 %666, %v528
  %v668 = vpop.permute.xlu0 %667
  %669 = vset.pattern.permute.xlu0 0
  %670 = vperm.xlu0 %669, %v529
  %v671 = vpop.permute.xlu0 %670
  %672 = vset.pattern.permute.xlu0 0
  %673 = vperm.xlu0 %672, %v530
  %v674 = vpop.permute.xlu0 %673
  %675 = vset.pattern.permute.xlu0 0
  %676 = vperm.xlu0 %675, %v531
  %v677 = vpop.permute.xlu0 %676
  %678 = vset.pattern.permute.xlu0 0
  %679 = vperm.xlu0 %678, %v532
  %v680 = vpop.permute.xlu0 %679
  %681 = vset.pattern.permute.xlu0 0
  %682 = vperm.xlu0 %681, %v533
  %v683 = vpop.permute.xlu0 %682
  %684 = vset.pattern.permute.xlu0 0
  %685 = vperm.xlu0 %684, %v534
  %v686 = vpop.permute.xlu0 %685
  %687 = vset.pattern.permute.xlu0 0
  %688 = vperm.xlu0 %687, %v535
  %v689 = vpop.permute.xlu0 %688
  %690 = vset.pattern.permute.xlu0 0
  %691 = vperm.xlu0 %690, %v536
  %v692 = vpop.permute.xlu0 %691
  %693 = vset.pattern.permute.xlu0 0
  %694 = vperm.xlu0 %693, %v537
  %v695 = vpop.permute.xlu0 %694
  %696 = vset.pattern.permute.xlu0 0
  %697 = vperm.xlu0 %696, %v538
  %v698 = vpop.permute.xlu0 %697
  %699 = vset.pattern.permute.xlu0 0
  %700 = vperm.xlu0 %699, %v539
  %v701 = vpop.permute.xlu0 %700
  %702 = vset.pattern.permute.xlu0 0
  %703 = vperm.xlu0 %702, %v540
  %v704 = vpop.permute.xlu0 %703
  %705 = vset.pattern.permute.xlu0 0
  %706 = vperm.xlu0 %705, %v541
  %v707 = vpop.permute.xlu0 %706
  %708 = vset.pattern.permute.xlu0 0
  %709 = vperm.xlu0 %708, %v542
  %v710 = vpop.permute.xlu0 %709
  %711 = vset.pattern.permute.xlu0 0
  %712 = vperm.xlu0 %711, %v543
  %v713 = vpop.permute.xlu0 %712
  %714 = vset.pattern.permute.xlu0 0
  %715 = vperm.xlu0 %714, %v544
  %v716 = vpop.permute.xlu0 %715
  %717 = vset.pattern.permute.xlu0 0
  %718 = vperm.xlu0 %717, %v545
  %v719 = vpop.permute.xlu0 %718
  %720 = vset.pattern.permute.xlu0 0
  %721 = vperm.xlu0 %720, %v546
  %v722 = vpop.permute.xlu0 %721
  %723 = vset.pattern.permute.xlu0 0
  %724 = vperm.xlu0 %723, %v547
  %v725 = vpop.permute.xlu0 %724
  %726 = vset.pattern.permute.xlu0 0
  %727 = vperm.xlu0 %726, %v548
  %v728 = vpop.permute.xlu0 %727
  %729 = vset.pattern.permute.xlu0 0
  %730 = vperm.xlu0 %729, %v549
  %v731 = vpop.permute.xlu0 %730
  %732 = vset.pattern.permute.xlu0 0
  %733 = vperm.xlu0 %732, %v550
  %v734 = vpop.permute.xlu0 %733
  %735 = vset.pattern.permute.xlu0 0
  %736 = vperm.xlu0 %735, %v551
  %v737 = vpop.permute.xlu0 %736
  %738 = vset.pattern.permute.xlu0 0
  %739 = vperm.xlu0 %738, %v552
  %v740 = vpop.permute.xlu0 %739
  %741 = vset.pattern.permute.xlu0 0
  %742 = vperm.xlu0 %741, %v553
  %v743 = vpop.permute.xlu0 %742
  %744 = vset.pattern.permute.xlu0 0
  %745 = vperm.xlu0 %744, %v554
  %v746 = vpop.permute.xlu0 %745
  %747 = vset.pattern.permute.xlu0 0
  %748 = vperm.xlu0 %747, %v555
  %v749 = vpop.permute.xlu0 %748
  %750 = vset.pattern.permute.xlu0 0
  %751 = vperm.xlu0 %750, %v556
  %v752 = vpop.permute.xlu0 %751
  %753 = vset.pattern.permute.xlu0 0
  %754 = vperm.xlu0 %753, %v557
  %v755 = vpop.permute.xlu0 %754
  %756 = vset.pattern.permute.xlu0 0
  %757 = vperm.xlu0 %756, %v558
  %v758 = vpop.permute.xlu0 %757
  %759 = vset.pattern.permute.xlu0 0
  %760 = vperm.xlu0 %759, %v559
  %v761 = vpop.permute.xlu0 %760
  %762 = vset.pattern.permute.xlu0 0
  %763 = vperm.xlu0 %762, %v560
  %v764 = vpop.permute.xlu0 %763
  %765 = vset.pattern.permute.xlu0 0
  %766 = vperm.xlu0 %765, %v561
  %v767 = vpop.permute.xlu0 %766
  %768 = vset.pattern.permute.xlu0 0
  %769 = vperm.xlu0 %768, %v562
  %v770 = vpop.permute.xlu0 %769
  %771 = vset.pattern.permute.xlu0 0
  %772 = vperm.xlu0 %771, %v563
  %v773 = vpop.permute.xlu0 %772
  %774 = vset.pattern.permute.xlu0 0
  %775 = vperm.xlu0 %774, %v564
  %v776 = vpop.permute.xlu0 %775
  %777 = vset.pattern.permute.xlu0 0
  %778 = vperm.xlu0 %777, %v565
  %v779 = vpop.permute.xlu0 %778
  %780 = vset.pattern.permute.xlu0 0
  %781 = vperm.xlu0 %780, %v566
  %v782 = vpop.permute.xlu0 %781
  %783 = vset.pattern.permute.xlu0 0
  %784 = vperm.xlu0 %783, %v567
  %v785 = vpop.permute.xlu0 %784
  %786 = vset.pattern.permute.xlu0 0
  %787 = vperm.xlu0 %786, %v568
  %v788 = vpop.permute.xlu0 %787
  %789 = vset.pattern.permute.xlu0 0
  %790 = vperm.xlu0 %789, %v569
  %v791 = vpop.permute.xlu0 %790
  %792 = vset.pattern.permute.xlu0 0
  %793 = vperm.xlu0 %792, %v570
  %v794 = vpop.permute.xlu0 %793
  %795 = vset.pattern.permute.xlu0 0
  %796 = vperm.xlu0 %795, %v571
  %v797 = vpop.permute.xlu0 %796
  %798 = vset.pattern.permute.xlu0 0
  %799 = vperm.xlu0 %798, %v572
  %v800 = vpop.permute.xlu0 %799
  %801 = vset.pattern.permute.xlu0 0
  %802 = vperm.xlu0 %801, %v573
  %v803 = vpop.permute.xlu0 %802
  %804 = vset.pattern.permute.xlu0 0
  %805 = vperm.xlu0 %804, %v574
  %v806 = vpop.permute.xlu0 %805
  %807 = vset.pattern.permute.xlu0 0
  %808 = vperm.xlu0 %807, %v575
  %v809 = vpop.permute.xlu0 %808
  %810 = vset.pattern.permute.xlu0 0
  %811 = vperm.xlu0 %810, %v576
  %v812 = vpop.permute.xlu0 %811
  %813 = vset.pattern.permute.xlu0 0
  %814 = vperm.xlu0 %813, %v577
  %v815 = vpop.permute.xlu0 %814
  %816 = vset.pattern.permute.xlu0 0
  %817 = vperm.xlu0 %816, %v578
  %v818 = vpop.permute.xlu0 %817
  %819 = vset.pattern.permute.xlu0 0
  %820 = vperm.xlu0 %819, %v579
  %v821 = vpop.permute.xlu0 %820
  %822 = vset.pattern.permute.xlu0 0
  %823 = vperm.xlu0 %822, %v580
  %v824 = vpop.permute.xlu0 %823
  %825 = vset.pattern.permute.xlu0 0
  %826 = vperm.xlu0 %825, %v581
  %v827 = vpop.permute.xlu0 %826
  %828 = vset.pattern.permute.xlu0 0
  %829 = vperm.xlu0 %828, %v582
  %v830 = vpop.permute.xlu0 %829
  %831 = vset.pattern.permute.xlu0 0
  %832 = vperm.xlu0 %831, %v583
  %v833 = vpop.permute.xlu0 %832
  %834 = vset.pattern.permute.xlu0 0
  %835 = vperm.xlu0 %834, %v584
  %v836 = vpop.permute.xlu0 %835
  %837 = vset.pattern.permute.xlu0 0
  %838 = vperm.xlu0 %837, %v585
  %v839 = vpop.permute.xlu0 %838
  %840 = vset.pattern.permute.xlu0 0
  %841 = vperm.xlu0 %840, %v586
  %v842 = vpop.permute.xlu0 %841
  %843 = vset.pattern.permute.xlu0 0
  %844 = vperm.xlu0 %843, %v587
  %v845 = vpop.permute.xlu0 %844
  %846 = vset.pattern.permute.xlu0 0
  %847 = vperm.xlu0 %846, %v588
  %v848 = vpop.permute.xlu0 %847
  %849 = vset.pattern.permute.xlu0 0
  %850 = vperm.xlu0 %849, %v589
  %v851 = vpop.permute.xlu0 %850
  %852 = vset.pattern.permute.xlu0 0
  %853 = vperm.xlu0 %852, %v590
  %v854 = vpop.permute.xlu0 %853
  %855 = vset.pattern.permute.xlu0 0
  %856 = vperm.xlu0 %855, %v591
  %v857 = vpop.permute.xlu0 %856
  %858 = vset.pattern.permute.xlu0 0
  %859 = vperm.xlu0 %858, %v592
  %v860 = vpop.permute.xlu0 %859
  %861 = vset.pattern.permute.xlu0 0
  %862 = vperm.xlu0 %861, %v593
  %v863 = vpop.permute.xlu0 %862
  %864 = vset.pattern.permute.xlu0 0
  %865 = vperm.xlu0 %864, %v594
  %v866 = vpop.permute.xlu0 %865
  %867 = vset.pattern.permute.xlu0 0
  %868 = vperm.xlu0 %867, %v595
  %v869 = vpop.permute.xlu0 %868
  %870 = vset.pattern.permute.xlu0 0
  %871 = vperm.xlu0 %870, %v596
  %v872 = vpop.permute.xlu0 %871
  %873 = vset.pattern.permute.xlu0 0
  %874 = vperm.xlu0 %873, %v597
  %v875 = vpop.permute.xlu0 %874
  %876 = vset.pattern.permute.xlu0 0
  %877 = vperm.xlu0 %876, %v598
  %v878 = vpop.permute.xlu0 %877
  %879 = vset.pattern.permute.xlu0 0
  %880 = vperm.xlu0 %879, %v599
  %v881 = vpop.permute.xlu0 %880
  %882 = vset.pattern.permute.xlu0 0
  %883 = vperm.xlu0 %882, %v600
  %v884 = vpop.permute.xlu0 %883
  %885 = vset.pattern.permute.xlu0 0
  %886 = vperm.xlu0 %885, %v601
  %v887 = vpop.permute.xlu0 %886
  %888 = vset.pattern.permute.xlu0 0
  %889 = vperm.xlu0 %888, %v602
  %v890 = vpop.permute.xlu0 %889
  %891 = vset.pattern.permute.xlu0 0
  %892 = vperm.xlu0 %891, %v603
  %v893 = vpop.permute.xlu0 %892
  %894 = vset.pattern.permute.xlu0 0
  %895 = vperm.xlu0 %894, %v604
  %v896 = vpop.permute.xlu0 %895
  %897 = vset.pattern.permute.xlu0 0
  %898 = vperm.xlu0 %897, %v605
  %v899 = vpop.permute.xlu0 %898
  %900 = vset.pattern.permute.xlu0 0
  %901 = vperm.xlu0 %900, %v606
  %v902 = vpop.permute.xlu0 %901
  %903 = vset.pattern.permute.xlu0 0
  %904 = vperm.xlu0 %903, %v607
  %v905 = vpop.permute.xlu0 %904
  %906 = vset.pattern.permute.xlu0 0
  %907 = vperm.xlu0 %906, %v608
  %v908 = vpop.permute.xlu0 %907
  %909 = vset.pattern.permute.xlu0 0
  %910 = vperm.xlu0 %909, %v609
  %v911 = vpop.permute.xlu0 %910
  %912 = vset.pattern.permute.xlu0 0
  %913 = vperm.xlu0 %912, %v610
  %v914 = vpop.permute.xlu0 %913
  %915 = vset.pattern.permute.xlu0 0
  %916 = vperm.xlu0 %915, %v611
  %v917 = vpop.permute.xlu0 %916
  %918 = vset.pattern.permute.xlu0 0
  %919 = vperm.xlu0 %918, %v612
  %v920 = vpop.permute.xlu0 %919
  %921 = vset.pattern.permute.xlu0 0
  %922 = vperm.xlu0 %921, %v613
  %v923 = vpop.permute.xlu0 %922
  %924 = vset.pattern.permute.xlu0 0
  %925 = vperm.xlu0 %924, %v614
  %v926 = vpop.permute.xlu0 %925
  %927 = vset.pattern.permute.xlu0 0
  %928 = vperm.xlu0 %927, %v615
  %v929 = vpop.permute.xlu0 %928
  %930 = vset.pattern.permute.xlu0 0
  %931 = vperm.xlu0 %930, %v616
  %v932 = vpop.permute.xlu0 %931
  %933 = vset.pattern.permute.xlu0 0
  %934 = vperm.xlu0 %933, %v617
  %v935 = vpop.permute.xlu0 %934
  %936 = vset.pattern.permute.xlu0 0
  %937 = vperm.xlu0 %936, %v618
  %v938 = vpop.permute.xlu0 %937
  %939 = vset.pattern.permute.xlu0 0
  %940 = vperm.xlu0 %939, %v619
  %v941 = vpop.permute.xlu0 %940
  %942 = vset.pattern.permute.xlu0 0
  %943 = vperm.xlu0 %942, %v620
  %v944 = vpop.permute.xlu0 %943
  %945 = vset.pattern.permute.xlu0 0
  %946 = vperm.xlu0 %945, %v621
  %v947 = vpop.permute.xlu0 %946
  %948 = vset.pattern.permute.xlu0 0
  %949 = vperm.xlu0 %948, %v622
  %v950 = vpop.permute.xlu0 %949
  %951 = vset.pattern.permute.xlu0 0
  %952 = vperm.xlu0 %951, %v623
  %v953 = vpop.permute.xlu0 %952
  %954 = vset.pattern.permute.xlu0 0
  %955 = vperm.xlu0 %954, %v624
  %v956 = vpop.permute.xlu0 %955
  %957 = vset.pattern.permute.xlu0 0
  %958 = vperm.xlu0 %957, %v625
  %v959 = vpop.permute.xlu0 %958
  %960 = vset.pattern.permute.xlu0 0
  %961 = vperm.xlu0 %960, %v626
  %v962 = vpop.permute.xlu0 %961
  %963 = vset.pattern.permute.xlu0 0
  %964 = vperm.xlu0 %963, %v627
  %v965 = vpop.permute.xlu0 %964
  %966 = vset.pattern.permute.xlu0 0
  %967 = vperm.xlu0 %966, %v628
  %v968 = vpop.permute.xlu0 %967
  %969 = vset.pattern.permute.xlu0 0
  %970 = vperm.xlu0 %969, %v629
  %v971 = vpop.permute.xlu0 %970
  %972 = vset.pattern.permute.xlu0 0
  %973 = vperm.xlu0 %972, %v630
  %v974 = vpop.permute.xlu0 %973
  %975 = vset.pattern.permute.xlu0 0
  %976 = vperm.xlu0 %975, %v631
  %v977 = vpop.permute.xlu0 %976
  %978 = vset.pattern.permute.xlu0 0
  %979 = vperm.xlu0 %978, %v632
  %v980 = vpop.permute.xlu0 %979
  %981 = vset.pattern.permute.xlu0 0
  %982 = vperm.xlu0 %981, %v633
  %v983 = vpop.permute.xlu0 %982
  %984 = vset.pattern.permute.xlu0 0
  %985 = vperm.xlu0 %984, %v634
  %v986 = vpop.permute.xlu0 %985
  %987 = vset.pattern.permute.xlu0 0
  %988 = vperm.xlu0 %987, %v635
  %v989 = vpop.permute.xlu0 %988
  %990 = vset.pattern.permute.xlu0 0
  %991 = vperm.xlu0 %990, %v636
  %v992 = vpop.permute.xlu0 %991
  %993 = vset.pattern.permute.xlu0 0
  %994 = vperm.xlu0 %993, %v637
  %v995 = vpop.permute.xlu0 %994
  %996 = vset.pattern.permute.xlu0 0
  %997 = vperm.xlu0 %996, %v638
  %v998 = vpop.permute.xlu0 %997
  %999 = vset.pattern.permute.xlu0 0
  %1000 = vperm.xlu0 %999, %v639
  %v1001 = vpop.permute.xlu0 %1000
  %1002 = vset.pattern.permute.xlu0 0
  %1003 = vperm.xlu0 %1002, %v640
  %v1004 = vpop.permute.xlu0 %1003
  %1005 = vset.pattern.permute.xlu0 0
  %1006 = vperm.xlu0 %1005, %v641
  %v1007 = vpop.permute.xlu0 %1006
  %1008 = vset.pattern.permute.xlu0 0
  %1009 = vperm.xlu0 %1008, %v642
  %v1010 = vpop.permute.xlu0 %1009
  %1011 = vset.pattern.permute.xlu0 0
  %1012 = vperm.xlu0 %1011, %v643
  %v1013 = vpop.permute.xlu0 %1012
  %1014 = vset.pattern.permute.xlu0 0
  %1015 = vperm.xlu0 %1014, %v644
  %v1016 = vpop.permute.xlu0 %1015
  %1017 = vset.pattern.permute.xlu0 0
  %1018 = vperm.xlu0 %1017, %v645
  %v1019 = vpop.permute.xlu0 %1018
  %1020 = vset.pattern.permute.xlu0 0
  %1021 = vperm.xlu0 %1020, %v646
  %v1022 = vpop.permute.xlu0 %1021
  %1023 = vset.pattern.permute.xlu0 0
  %1024 = vperm.xlu0 %1023, %v647
  %v1025 = vpop.permute.xlu0 %1024
  %1026 = vset.pattern.permute.xlu0 0
  %1027 = vperm.xlu0 %1026, %v648
  %v1028 = vpop.permute.xlu0 %1027
  %1029 = vset.pattern.permute.xlu0 0
  %1030 = vperm.xlu0 %1029, %v649
  %v1031 = vpop.permute.xlu0 %1030
  %1032 = vset.pattern.permute.xlu0 0
  %1033 = vperm.xlu0 %1032, %v650
  %v1034 = vpop.permute.xlu0 %1033
  %vm1035 = vcmp.eq.s32.totalorder %v653, 1
  %vm1036 = vcmp.eq.s32.totalorder %v656, 1
  %vm1037 = vcmp.eq.s32.totalorder %v659, 1
  %vm1038 = vcmp.eq.s32.totalorder %v662, 1
  %vm1039 = vcmp.eq.s32.totalorder %v665, 1
  %vm1040 = vcmp.eq.s32.totalorder %v668, 1
  %vm1041 = vcmp.eq.s32.totalorder %v671, 1
  %vm1042 = vcmp.eq.s32.totalorder %v674, 1
  %vm1043 = vcmp.eq.s32.totalorder %v677, 1
  %vm1044 = vcmp.eq.s32.totalorder %v680, 1
  %vm1045 = vcmp.eq.s32.totalorder %v683, 1
  %vm1046 = vcmp.eq.s32.totalorder %v686, 1
  %vm1047 = vcmp.eq.s32.totalorder %v689, 1
  %vm1048 = vcmp.eq.s32.totalorder %v692, 1
  %vm1049 = vcmp.eq.s32.totalorder %v695, 1
  %vm1050 = vcmp.eq.s32.totalorder %v698, 1
  %vm1051 = vcmp.eq.s32.totalorder %v701, 1
  %vm1052 = vcmp.eq.s32.totalorder %v704, 1
  %vm1053 = vcmp.eq.s32.totalorder %v707, 1
  %vm1054 = vcmp.eq.s32.totalorder %v710, 1
  %vm1055 = vcmp.eq.s32.totalorder %v713, 1
  %vm1056 = vcmp.eq.s32.totalorder %v716, 1
  %vm1057 = vcmp.eq.s32.totalorder %v719, 1
  %vm1058 = vcmp.eq.s32.totalorder %v722, 1
  %vm1059 = vcmp.eq.s32.totalorder %v725, 1
  %vm1060 = vcmp.eq.s32.totalorder %v728, 1
  %vm1061 = vcmp.eq.s32.totalorder %v731, 1
  %vm1062 = vcmp.eq.s32.totalorder %v734, 1
  %vm1063 = vcmp.eq.s32.totalorder %v737, 1
  %vm1064 = vcmp.eq.s32.totalorder %v740, 1
  %vm1065 = vcmp.eq.s32.totalorder %v743, 1
  %vm1066 = vcmp.eq.s32.totalorder %v746, 1
  %vm1067 = vcmp.eq.s32.totalorder %v749, 1
  %vm1068 = vcmp.eq.s32.totalorder %v752, 1
  %vm1069 = vcmp.eq.s32.totalorder %v755, 1
  %vm1070 = vcmp.eq.s32.totalorder %v758, 1
  %vm1071 = vcmp.eq.s32.totalorder %v761, 1
  %vm1072 = vcmp.eq.s32.totalorder %v764, 1
  %vm1073 = vcmp.eq.s32.totalorder %v767, 1
  %vm1074 = vcmp.eq.s32.totalorder %v770, 1
  %vm1075 = vcmp.eq.s32.totalorder %v773, 1
  %vm1076 = vcmp.eq.s32.totalorder %v776, 1
  %vm1077 = vcmp.eq.s32.totalorder %v779, 1
  %vm1078 = vcmp.eq.s32.totalorder %v782, 1
  %vm1079 = vcmp.eq.s32.totalorder %v785, 1
  %vm1080 = vcmp.eq.s32.totalorder %v788, 1
  %vm1081 = vcmp.eq.s32.totalorder %v791, 1
  %vm1082 = vcmp.eq.s32.totalorder %v794, 1
  %vm1083 = vcmp.eq.s32.totalorder %v797, 1
  %vm1084 = vcmp.eq.s32.totalorder %v800, 1
  %vm1085 = vcmp.eq.s32.totalorder %v803, 1
  %vm1086 = vcmp.eq.s32.totalorder %v806, 1
  %vm1087 = vcmp.eq.s32.totalorder %v809, 1
  %vm1088 = vcmp.eq.s32.totalorder %v812, 1
  %vm1089 = vcmp.eq.s32.totalorder %v815, 1
  %vm1090 = vcmp.eq.s32.totalorder %v818, 1
  %vm1091 = vcmp.eq.s32.totalorder %v821, 1
  %vm1092 = vcmp.eq.s32.totalorder %v824, 1
  %vm1093 = vcmp.eq.s32.totalorder %v827, 1
  %vm1094 = vcmp.eq.s32.totalorder %v830, 1
  %vm1095 = vcmp.eq.s32.totalorder %v833, 1
  %vm1096 = vcmp.eq.s32.totalorder %v836, 1
  %vm1097 = vcmp.eq.s32.totalorder %v839, 1
  %vm1098 = vcmp.eq.s32.totalorder %v842, 1
  %vm1099 = vcmp.eq.s32.totalorder %v845, 1
  %vm1100 = vcmp.eq.s32.totalorder %v848, 1
  %vm1101 = vcmp.eq.s32.totalorder %v851, 1
  %vm1102 = vcmp.eq.s32.totalorder %v854, 1
  %vm1103 = vcmp.eq.s32.totalorder %v857, 1
  %vm1104 = vcmp.eq.s32.totalorder %v860, 1
  %vm1105 = vcmp.eq.s32.totalorder %v863, 1
  %vm1106 = vcmp.eq.s32.totalorder %v866, 1
  %vm1107 = vcmp.eq.s32.totalorder %v869, 1
  %vm1108 = vcmp.eq.s32.totalorder %v872, 1
  %vm1109 = vcmp.eq.s32.totalorder %v875, 1
  %vm1110 = vcmp.eq.s32.totalorder %v878, 1
  %vm1111 = vcmp.eq.s32.totalorder %v881, 1
  %vm1112 = vcmp.eq.s32.totalorder %v884, 1
  %vm1113 = vcmp.eq.s32.totalorder %v887, 1
  %vm1114 = vcmp.eq.s32.totalorder %v890, 1
  %vm1115 = vcmp.eq.s32.totalorder %v893, 1
  %vm1116 = vcmp.eq.s32.totalorder %v896, 1
  %vm1117 = vcmp.eq.s32.totalorder %v899, 1
  %vm1118 = vcmp.eq.s32.totalorder %v902, 1
  %vm1119 = vcmp.eq.s32.totalorder %v905, 1
  %vm1120 = vcmp.eq.s32.totalorder %v908, 1
  %vm1121 = vcmp.eq.s32.totalorder %v911, 1
  %vm1122 = vcmp.eq.s32.totalorder %v914, 1
  %vm1123 = vcmp.eq.s32.totalorder %v917, 1
  %vm1124 = vcmp.eq.s32.totalorder %v920, 1
  %vm1125 = vcmp.eq.s32.totalorder %v923, 1
  %vm1126 = vcmp.eq.s32.totalorder %v926, 1
  %vm1127 = vcmp.eq.s32.totalorder %v929, 1
  %vm1128 = vcmp.eq.s32.totalorder %v932, 1
  %vm1129 = vcmp.eq.s32.totalorder %v935, 1
  %vm1130 = vcmp.eq.s32.totalorder %v938, 1
  %vm1131 = vcmp.eq.s32.totalorder %v941, 1
  %vm1132 = vcmp.eq.s32.totalorder %v944, 1
  %vm1133 = vcmp.eq.s32.totalorder %v947, 1
  %vm1134 = vcmp.eq.s32.totalorder %v950, 1
  %vm1135 = vcmp.eq.s32.totalorder %v953, 1
  %vm1136 = vcmp.eq.s32.totalorder %v956, 1
  %vm1137 = vcmp.eq.s32.totalorder %v959, 1
  %vm1138 = vcmp.eq.s32.totalorder %v962, 1
  %vm1139 = vcmp.eq.s32.totalorder %v965, 1
  %vm1140 = vcmp.eq.s32.totalorder %v968, 1
  %vm1141 = vcmp.eq.s32.totalorder %v971, 1
  %vm1142 = vcmp.eq.s32.totalorder %v974, 1
  %vm1143 = vcmp.eq.s32.totalorder %v977, 1
  %vm1144 = vcmp.eq.s32.totalorder %v980, 1
  %vm1145 = vcmp.eq.s32.totalorder %v983, 1
  %vm1146 = vcmp.eq.s32.totalorder %v986, 1
  %vm1147 = vcmp.eq.s32.totalorder %v989, 1
  %vm1148 = vcmp.eq.s32.totalorder %v992, 1
  %vm1149 = vcmp.eq.s32.totalorder %v995, 1
  %vm1150 = vcmp.eq.s32.totalorder %v998, 1
  %vm1151 = vcmp.eq.s32.totalorder %v1001, 1
  %vm1152 = vcmp.eq.s32.totalorder %v1004, 1
  %vm1153 = vcmp.eq.s32.totalorder %v1007, 1
  %vm1154 = vcmp.eq.s32.totalorder %v1010, 1
  %vm1155 = vcmp.eq.s32.totalorder %v1013, 1
  %vm1156 = vcmp.eq.s32.totalorder %v1016, 1
  %vm1157 = vcmp.eq.s32.totalorder %v1019, 1
  %vm1158 = vcmp.eq.s32.totalorder %v1022, 1
  %vm1159 = vcmp.eq.s32.totalorder %v1025, 1
  %vm1160 = vcmp.eq.s32.totalorder %v1028, 1
  %vm1161 = vcmp.eq.s32.totalorder %v1031, 1
  %vm1162 = vcmp.eq.s32.totalorder %v1034, 1
  %v1163 = vsel %vm1035, 0, %v11
  %v1164 = vsel %vm1036, 0, %v12
  %v1165 = vsel %vm1037, 0, %v13
  %v1166 = vsel %vm1038, 0, %v14
  %v1167 = vsel %vm1039, 0, %v15
  %v1168 = vsel %vm1040, 0, %v16
  %v1169 = vsel %vm1041, 0, %v17
  %v1170 = vsel %vm1042, 0, %v18
  %v1171 = vsel %vm1043, 0, %v19
  %v1172 = vsel %vm1044, 0, %v20
  %v1173 = vsel %vm1045, 0, %v21
  %v1174 = vsel %vm1046, 0, %v22
  %v1175 = vsel %vm1047, 0, %v23
  %v1176 = vsel %vm1048, 0, %v24
  %v1177 = vsel %vm1049, 0, %v25
  %v1178 = vsel %vm1050, 0, %v26
  %v1179 = vsel %vm1051, 0, %v27
  %v1180 = vsel %vm1052, 0, %v28
  %v1181 = vsel %vm1053, 0, %v29
  %v1182 = vsel %vm1054, 0, %v30
  %v1183 = vsel %vm1055, 0, %v31
  %v1184 = vsel %vm1056, 0, %v32
  %v1185 = vsel %vm1057, 0, %v33
  %v1186 = vsel %vm1058, 0, %v34
  %v1187 = vsel %vm1059, 0, %v35
  %v1188 = vsel %vm1060, 0, %v36
  %v1189 = vsel %vm1061, 0, %v37
  %v1190 = vsel %vm1062, 0, %v38
  %v1191 = vsel %vm1063, 0, %v39
  %v1192 = vsel %vm1064, 0, %v40
  %v1193 = vsel %vm1065, 0, %v41
  %v1194 = vsel %vm1066, 0, %v42
  %v1195 = vsel %vm1067, 0, %v43
  %v1196 = vsel %vm1068, 0, %v44
  %v1197 = vsel %vm1069, 0, %v45
  %v1198 = vsel %vm1070, 0, %v46
  %v1199 = vsel %vm1071, 0, %v47
  %v1200 = vsel %vm1072, 0, %v48
  %v1201 = vsel %vm1073, 0, %v49
  %v1202 = vsel %vm1074, 0, %v50
  %v1203 = vsel %vm1075, 0, %v51
  %v1204 = vsel %vm1076, 0, %v52
  %v1205 = vsel %vm1077, 0, %v53
  %v1206 = vsel %vm1078, 0, %v54
  %v1207 = vsel %vm1079, 0, %v55
  %v1208 = vsel %vm1080, 0, %v56
  %v1209 = vsel %vm1081, 0, %v57
  %v1210 = vsel %vm1082, 0, %v58
  %v1211 = vsel %vm1083, 0, %v59
  %v1212 = vsel %vm1084, 0, %v60
  %v1213 = vsel %vm1085, 0, %v61
  %v1214 = vsel %vm1086, 0, %v62
  %v1215 = vsel %vm1087, 0, %v63
  %v1216 = vsel %vm1088, 0, %v64
  %v1217 = vsel %vm1089, 0, %v65
  %v1218 = vsel %vm1090, 0, %v66
  %v1219 = vsel %vm1091, 0, %v67
  %v1220 = vsel %vm1092, 0, %v68
  %v1221 = vsel %vm1093, 0, %v69
  %v1222 = vsel %vm1094, 0, %v70
  %v1223 = vsel %vm1095, 0, %v71
  %v1224 = vsel %vm1096, 0, %v72
  %v1225 = vsel %vm1097, 0, %v73
  %v1226 = vsel %vm1098, 0, %v74
  %v1227 = vsel %vm1099, 0, %v75
  %v1228 = vsel %vm1100, 0, %v76
  %v1229 = vsel %vm1101, 0, %v77
  %v1230 = vsel %vm1102, 0, %v78
  %v1231 = vsel %vm1103, 0, %v79
  %v1232 = vsel %vm1104, 0, %v80
  %v1233 = vsel %vm1105, 0, %v81
  %v1234 = vsel %vm1106, 0, %v82
  %v1235 = vsel %vm1107, 0, %v83
  %v1236 = vsel %vm1108, 0, %v84
  %v1237 = vsel %vm1109, 0, %v85
  %v1238 = vsel %vm1110, 0, %v86
  %v1239 = vsel %vm1111, 0, %v87
  %v1240 = vsel %vm1112, 0, %v88
  %v1241 = vsel %vm1113, 0, %v89
  %v1242 = vsel %vm1114, 0, %v90
  %v1243 = vsel %vm1115, 0, %v91
  %v1244 = vsel %vm1116, 0, %v92
  %v1245 = vsel %vm1117, 0, %v93
  %v1246 = vsel %vm1118, 0, %v94
  %v1247 = vsel %vm1119, 0, %v95
  %v1248 = vsel %vm1120, 0, %v96
  %v1249 = vsel %vm1121, 0, %v97
  %v1250 = vsel %vm1122, 0, %v98
  %v1251 = vsel %vm1123, 0, %v99
  %v1252 = vsel %vm1124, 0, %v100
  %v1253 = vsel %vm1125, 0, %v101
  %v1254 = vsel %vm1126, 0, %v102
  %v1255 = vsel %vm1127, 0, %v103
  %v1256 = vsel %vm1128, 0, %v104
  %v1257 = vsel %vm1129, 0, %v105
  %v1258 = vsel %vm1130, 0, %v106
  %v1259 = vsel %vm1131, 0, %v107
  %v1260 = vsel %vm1132, 0, %v108
  %v1261 = vsel %vm1133, 0, %v109
  %v1262 = vsel %vm1134, 0, %v110
  %v1263 = vsel %vm1135, 0, %v111
  %v1264 = vsel %vm1136, 0, %v112
  %v1265 = vsel %vm1137, 0, %v113
  %v1266 = vsel %vm1138, 0, %v114
  %v1267 = vsel %vm1139, 0, %v115
  %v1268 = vsel %vm1140, 0, %v116
  %v1269 = vsel %vm1141, 0, %v117
  %v1270 = vsel %vm1142, 0, %v118
  %v1271 = vsel %vm1143, 0, %v119
  %v1272 = vsel %vm1144, 0, %v120
  %v1273 = vsel %vm1145, 0, %v121
  %v1274 = vsel %vm1146, 0, %v122
  %v1275 = vsel %vm1147, 0, %v123
  %v1276 = vsel %vm1148, 0, %v124
  %v1277 = vsel %vm1149, 0, %v125
  %v1278 = vsel %vm1150, 0, %v126
  %v1279 = vsel %vm1151, 0, %v127
  %v1280 = vsel %vm1152, 0, %v128
  %v1281 = vsel %vm1153, 0, %v129
  %v1282 = vsel %vm1154, 0, %v130
  %v1283 = vsel %vm1155, 0, %v131
  %v1284 = vsel %vm1156, 0, %v132
  %v1285 = vsel %vm1157, 0, %v133
  %v1286 = vsel %vm1158, 0, %v134
  %v1287 = vsel %vm1159, 0, %v135
  %v1288 = vsel %vm1160, 0, %v136
  %v1289 = vsel %vm1161, 0, %v137
  %v1290 = vsel %vm1162, 0, %v138
  %vm1291 = vcmask 785408
  %1292 = vst.msk [vmem:[%s2] sm:$0xff] %vm1291, %v1163
  %1293 = vst.msk [vmem:[%s2 + $0x8] sm:$0xff] %vm1291, %v1164
  %1294 = vst.msk [vmem:[%s2 + $0x10] sm:$0xff] %vm1291, %v1165
  %1295 = vst.msk [vmem:[%s2 + $0x18] sm:$0xff] %vm1291, %v1166
  %1296 = vst.msk [vmem:[%s2 + $0x20] sm:$0xff] %vm1291, %v1167
  %1297 = vst.msk [vmem:[%s2 + $0x28] sm:$0xff] %vm1291, %v1168
  %1298 = vst.msk [vmem:[%s2 + $0x30] sm:$0xff] %vm1291, %v1169
  %1299 = vst.msk [vmem:[%s2 + $0x38] sm:$0xff] %vm1291, %v1170
  %1300 = vst.msk [vmem:[%s2 + $0x40] sm:$0xff] %vm1291, %v1171
  %1301 = vst.msk [vmem:[%s2 + $0x48] sm:$0xff] %vm1291, %v1172
  %1302 = vst.msk [vmem:[%s2 + $0x50] sm:$0xff] %vm1291, %v1173
  %1303 = vst.msk [vmem:[%s2 + $0x58] sm:$0xff] %vm1291, %v1174
  %1304 = vst.msk [vmem:[%s2 + $0x60] sm:$0xff] %vm1291, %v1175
  %1305 = vst.msk [vmem:[%s2 + $0x68] sm:$0xff] %vm1291, %v1176
  %1306 = vst.msk [vmem:[%s2 + $0x70] sm:$0xff] %vm1291, %v1177
  %1307 = vst.msk [vmem:[%s2 + $0x78] sm:$0xff] %vm1291, %v1178
  %1308 = vst.msk [vmem:[%s2 + $0x80] sm:$0xff] %vm1291, %v1179
  %1309 = vst.msk [vmem:[%s2 + $0x88] sm:$0xff] %vm1291, %v1180
  %1310 = vst.msk [vmem:[%s2 + $0x90] sm:$0xff] %vm1291, %v1181
  %1311 = vst.msk [vmem:[%s2 + $0x98] sm:$0xff] %vm1291, %v1182
  %1312 = vst.msk [vmem:[%s2 + $0xa0] sm:$0xff] %vm1291, %v1183
  %1313 = vst.msk [vmem:[%s2 + $0xa8] sm:$0xff] %vm1291, %v1184
  %1314 = vst.msk [vmem:[%s2 + $0xb0] sm:$0xff] %vm1291, %v1185
  %1315 = vst.msk [vmem:[%s2 + $0xb8] sm:$0xff] %vm1291, %v1186
  %1316 = vst.msk [vmem:[%s2 + $0xc0] sm:$0xff] %vm1291, %v1187
  %1317 = vst.msk [vmem:[%s2 + $0xc8] sm:$0xff] %vm1291, %v1188
  %1318 = vst.msk [vmem:[%s2 + $0xd0] sm:$0xff] %vm1291, %v1189
  %1319 = vst.msk [vmem:[%s2 + $0xd8] sm:$0xff] %vm1291, %v1190
  %1320 = vst.msk [vmem:[%s2 + $0xe0] sm:$0xff] %vm1291, %v1191
  %1321 = vst.msk [vmem:[%s2 + $0xe8] sm:$0xff] %vm1291, %v1192
  %1322 = vst.msk [vmem:[%s2 + $0xf0] sm:$0xff] %vm1291, %v1193
  %1323 = vst.msk [vmem:[%s2 + $0xf8] sm:$0xff] %vm1291, %v1194
  %1324 = vst.msk [vmem:[%s2 + $0x100] sm:$0xff] %vm1291, %v1195
  %1325 = vst.msk [vmem:[%s2 + $0x108] sm:$0xff] %vm1291, %v1196
  %1326 = vst.msk [vmem:[%s2 + $0x110] sm:$0xff] %vm1291, %v1197
  %1327 = vst.msk [vmem:[%s2 + $0x118] sm:$0xff] %vm1291, %v1198
  %1328 = vst.msk [vmem:[%s2 + $0x120] sm:$0xff] %vm1291, %v1199
  %1329 = vst.msk [vmem:[%s2 + $0x128] sm:$0xff] %vm1291, %v1200
  %1330 = vst.msk [vmem:[%s2 + $0x130] sm:$0xff] %vm1291, %v1201
  %1331 = vst.msk [vmem:[%s2 + $0x138] sm:$0xff] %vm1291, %v1202
  %1332 = vst.msk [vmem:[%s2 + $0x140] sm:$0xff] %vm1291, %v1203
  %1333 = vst.msk [vmem:[%s2 + $0x148] sm:$0xff] %vm1291, %v1204
  %1334 = vst.msk [vmem:[%s2 + $0x150] sm:$0xff] %vm1291, %v1205
  %1335 = vst.msk [vmem:[%s2 + $0x158] sm:$0xff] %vm1291, %v1206
  %1336 = vst.msk [vmem:[%s2 + $0x160] sm:$0xff] %vm1291, %v1207
  %1337 = vst.msk [vmem:[%s2 + $0x168] sm:$0xff] %vm1291, %v1208
  %1338 = vst.msk [vmem:[%s2 + $0x170] sm:$0xff] %vm1291, %v1209
  %1339 = vst.msk [vmem:[%s2 + $0x178] sm:$0xff] %vm1291, %v1210
  %1340 = vst.msk [vmem:[%s2 + $0x180] sm:$0xff] %vm1291, %v1211
  %1341 = vst.msk [vmem:[%s2 + $0x188] sm:$0xff] %vm1291, %v1212
  %1342 = vst.msk [vmem:[%s2 + $0x190] sm:$0xff] %vm1291, %v1213
  %1343 = vst.msk [vmem:[%s2 + $0x198] sm:$0xff] %vm1291, %v1214
  %1344 = vst.msk [vmem:[%s2 + $0x1a0] sm:$0xff] %vm1291, %v1215
  %1345 = vst.msk [vmem:[%s2 + $0x1a8] sm:$0xff] %vm1291, %v1216
  %1346 = vst.msk [vmem:[%s2 + $0x1b0] sm:$0xff] %vm1291, %v1217
  %1347 = vst.msk [vmem:[%s2 + $0x1b8] sm:$0xff] %vm1291, %v1218
  %1348 = vst.msk [vmem:[%s2 + $0x1c0] sm:$0xff] %vm1291, %v1219
  %1349 = vst.msk [vmem:[%s2 + $0x1c8] sm:$0xff] %vm1291, %v1220
  %1350 = vst.msk [vmem:[%s2 + $0x1d0] sm:$0xff] %vm1291, %v1221
  %1351 = vst.msk [vmem:[%s2 + $0x1d8] sm:$0xff] %vm1291, %v1222
  %1352 = vst.msk [vmem:[%s2 + $0x1e0] sm:$0xff] %vm1291, %v1223
  %1353 = vst.msk [vmem:[%s2 + $0x1e8] sm:$0xff] %vm1291, %v1224
  %1354 = vst.msk [vmem:[%s2 + $0x1f0] sm:$0xff] %vm1291, %v1225
  %1355 = vst.msk [vmem:[%s2 + $0x1f8] sm:$0xff] %vm1291, %v1226
  %1356 = vst.msk [vmem:[%s2 + $0x200] sm:$0xff] %vm1291, %v1227
  %1357 = vst.msk [vmem:[%s2 + $0x208] sm:$0xff] %vm1291, %v1228
  %1358 = vst.msk [vmem:[%s2 + $0x210] sm:$0xff] %vm1291, %v1229
  %1359 = vst.msk [vmem:[%s2 + $0x218] sm:$0xff] %vm1291, %v1230
  %1360 = vst.msk [vmem:[%s2 + $0x220] sm:$0xff] %vm1291, %v1231
  %1361 = vst.msk [vmem:[%s2 + $0x228] sm:$0xff] %vm1291, %v1232
  %1362 = vst.msk [vmem:[%s2 + $0x230] sm:$0xff] %vm1291, %v1233
  %1363 = vst.msk [vmem:[%s2 + $0x238] sm:$0xff] %vm1291, %v1234
  %1364 = vst.msk [vmem:[%s2 + $0x240] sm:$0xff] %vm1291, %v1235
  %1365 = vst.msk [vmem:[%s2 + $0x248] sm:$0xff] %vm1291, %v1236
  %1366 = vst.msk [vmem:[%s2 + $0x250] sm:$0xff] %vm1291, %v1237
  %1367 = vst.msk [vmem:[%s2 + $0x258] sm:$0xff] %vm1291, %v1238
  %1368 = vst.msk [vmem:[%s2 + $0x260] sm:$0xff] %vm1291, %v1239
  %1369 = vst.msk [vmem:[%s2 + $0x268] sm:$0xff] %vm1291, %v1240
  %1370 = vst.msk [vmem:[%s2 + $0x270] sm:$0xff] %vm1291, %v1241
  %1371 = vst.msk [vmem:[%s2 + $0x278] sm:$0xff] %vm1291, %v1242
  %1372 = vst.msk [vmem:[%s2 + $0x280] sm:$0xff] %vm1291, %v1243
  %1373 = vst.msk [vmem:[%s2 + $0x288] sm:$0xff] %vm1291, %v1244
  %1374 = vst.msk [vmem:[%s2 + $0x290] sm:$0xff] %vm1291, %v1245
  %1375 = vst.msk [vmem:[%s2 + $0x298] sm:$0xff] %vm1291, %v1246
  %1376 = vst.msk [vmem:[%s2 + $0x2a0] sm:$0xff] %vm1291, %v1247
  %1377 = vst.msk [vmem:[%s2 + $0x2a8] sm:$0xff] %vm1291, %v1248
  %1378 = vst.msk [vmem:[%s2 + $0x2b0] sm:$0xff] %vm1291, %v1249
  %1379 = vst.msk [vmem:[%s2 + $0x2b8] sm:$0xff] %vm1291, %v1250
  %1380 = vst.msk [vmem:[%s2 + $0x2c0] sm:$0xff] %vm1291, %v1251
  %1381 = vst.msk [vmem:[%s2 + $0x2c8] sm:$0xff] %vm1291, %v1252
  %1382 = vst.msk [vmem:[%s2 + $0x2d0] sm:$0xff] %vm1291, %v1253
  %1383 = vst.msk [vmem:[%s2 + $0x2d8] sm:$0xff] %vm1291, %v1254
  %1384 = vst.msk [vmem:[%s2 + $0x2e0] sm:$0xff] %vm1291, %v1255
  %1385 = vst.msk [vmem:[%s2 + $0x2e8] sm:$0xff] %vm1291, %v1256
  %1386 = vst.msk [vmem:[%s2 + $0x2f0] sm:$0xff] %vm1291, %v1257
  %1387 = vst.msk [vmem:[%s2 + $0x2f8] sm:$0xff] %vm1291, %v1258
  %1388 = vst.msk [vmem:[%s2 + $0x300] sm:$0xff] %vm1291, %v1259
  %1389 = vst.msk [vmem:[%s2 + $0x308] sm:$0xff] %vm1291, %v1260
  %1390 = vst.msk [vmem:[%s2 + $0x310] sm:$0xff] %vm1291, %v1261
  %1391 = vst.msk [vmem:[%s2 + $0x318] sm:$0xff] %vm1291, %v1262
  %1392 = vst.msk [vmem:[%s2 + $0x320] sm:$0xff] %vm1291, %v1263
  %1393 = vst.msk [vmem:[%s2 + $0x328] sm:$0xff] %vm1291, %v1264
  %1394 = vst.msk [vmem:[%s2 + $0x330] sm:$0xff] %vm1291, %v1265
  %1395 = vst.msk [vmem:[%s2 + $0x338] sm:$0xff] %vm1291, %v1266
  %1396 = vst.msk [vmem:[%s2 + $0x340] sm:$0xff] %vm1291, %v1267
  %1397 = vst.msk [vmem:[%s2 + $0x348] sm:$0xff] %vm1291, %v1268
  %1398 = vst.msk [vmem:[%s2 + $0x350] sm:$0xff] %vm1291, %v1269
  %1399 = vst.msk [vmem:[%s2 + $0x358] sm:$0xff] %vm1291, %v1270
  %1400 = vst.msk [vmem:[%s2 + $0x360] sm:$0xff] %vm1291, %v1271
  %1401 = vst.msk [vmem:[%s2 + $0x368] sm:$0xff] %vm1291, %v1272
  %1402 = vst.msk [vmem:[%s2 + $0x370] sm:$0xff] %vm1291, %v1273
  %1403 = vst.msk [vmem:[%s2 + $0x378] sm:$0xff] %vm1291, %v1274
  %1404 = vst.msk [vmem:[%s2 + $0x380] sm:$0xff] %vm1291, %v1275
  %1405 = vst.msk [vmem:[%s2 + $0x388] sm:$0xff] %vm1291, %v1276
  %1406 = vst.msk [vmem:[%s2 + $0x390] sm:$0xff] %vm1291, %v1277
  %1407 = vst.msk [vmem:[%s2 + $0x398] sm:$0xff] %vm1291, %v1278
  %1408 = vst.msk [vmem:[%s2 + $0x3a0] sm:$0xff] %vm1291, %v1279
  %1409 = vst.msk [vmem:[%s2 + $0x3a8] sm:$0xff] %vm1291, %v1280
  %1410 = vst.msk [vmem:[%s2 + $0x3b0] sm:$0xff] %vm1291, %v1281
  %1411 = vst.msk [vmem:[%s2 + $0x3b8] sm:$0xff] %vm1291, %v1282
  %1412 = vst.msk [vmem:[%s2 + $0x3c0] sm:$0xff] %vm1291, %v1283
  %1413 = vst.msk [vmem:[%s2 + $0x3c8] sm:$0xff] %vm1291, %v1284
  %1414 = vst.msk [vmem:[%s2 + $0x3d0] sm:$0xff] %vm1291, %v1285
  %1415 = vst.msk [vmem:[%s2 + $0x3d8] sm:$0xff] %vm1291, %v1286
  %1416 = vst.msk [vmem:[%s2 + $0x3e0] sm:$0xff] %vm1291, %v1287
  %1417 = vst.msk [vmem:[%s2 + $0x3e8] sm:$0xff] %vm1291, %v1288
  %1418 = vst.msk [vmem:[%s2 + $0x3f0] sm:$0xff] %vm1291, %v1289
  %1419 = vst.msk [vmem:[%s2 + $0x3f8] sm:$0xff] %vm1291, %v1290
  // Predicated region
  $region10: #{tpu_custom_call.1} parent=0 // pred_check
    _
  $region11: #{tpu_custom_call.1} parent=0 // pred_check_branch
    %1421 = sbr.rel (0) target = $region13
  $region12: #{tpu_custom_call.1} parent=0 // pred_region
    _
  $region13: #{tpu_custom_call.1} parent=0 // pred_fallthru
    _
  // Predicated region
  $region14: #{tpu_custom_call.1} parent=0 // pred_check
    _
  $region15: #{tpu_custom_call.1} parent=0 // pred_check_branch
    %1423 = sbr.rel (0) target = $region17
  $region16: #{tpu_custom_call.1} parent=0 // pred_region
    _
  $region17: #{tpu_custom_call.1} parent=0 // pred_fallthru
    _

</llo_original>
